<compile_context>
chip_gen: v6e
topology: v6e:2x2x1
jax: 0.10.0
libtpu: 0.0.40
codegen_flags: <defaults>
</compile_context>

<pallas_src>
import math
import functools

import jax
import jax.numpy as jnp
from jax.experimental import pallas as pl
from jax.experimental.pallas import tpu as pltpu


# ----------------------------------------------------------------------------
# Pallas kernel: one encoder layer per grid step, whole batch per step.
# Grid = (n_layer,).  The running activation lives in out_ref, whose block
# index is constant across the layer axis (written back to HBM once).
# ----------------------------------------------------------------------------
def _encoder_stack_kernel(
    x_ref,      # (B*T, C)      f32   embeddings + positional encoding
    wqkv_ref,   # (C, 3C)       bf16  [Wq*(1/sqrt(HS)) | Wk | Wv]
    wp_ref,     # (C, C)        bf16  attention output projection
    w1_ref,     # (C, 4C)       bf16  fc1
    w2_ref,     # (4C, C)       bf16  fc2
    pvec_ref,   # (6, C)        f32   [g1, b1, g2, b2, proj bias, fc2 bias]
    bb1_ref,    # (1, 4C)       f32   fc1 bias
    out_ref,    # (B*T, C)      f32   resident accumulator across layers
    wei_ref,    # (H, B, T, T)  wei dtype   attention maps of this layer
):
    layer = pl.program_id(0)
    H, B, T, _ = wei_ref.shape
    BT, C = out_ref.shape
    HS = C // H
    bf16 = jnp.bfloat16

    # First layer: load the activations into the resident output block.
    @pl.when(layer == 0)
    def _():
        out_ref[...] = x_ref[...].astype(out_ref.dtype)

    x = out_ref[...]                                    # (BT, C) f32

    # Packed per-layer small params (one DMA'd (6, C) block + one (1, 4C)).
    g1 = pvec_ref[0:1, :]
    b1 = pvec_ref[1:2, :]
    g2 = pvec_ref[2:3, :]
    b2 = pvec_ref[3:4, :]
    bp = pvec_ref[4:5, :]
    bb2 = pvec_ref[5:6, :]
    bb1 = bb1_ref[...]                                  # (1, 4C)

    def layernorm(v, gamma, beta):
        mu = jnp.mean(v, axis=-1, keepdims=True)
        var = jnp.mean(jnp.square(v - mu), axis=-1, keepdims=True)
        return (v - mu) * jax.lax.rsqrt(var + 1e-5) * gamma + beta

    # ---- self-attention on norm1(x), unmasked ----
    xn = layernorm(x, g1, b1)                           # (BT, C) f32

    # One wide MXU matmul for Q, K, V of all heads and all batch rows
    # (bf16 in, f32 accumulate).  M = B*T rows hit the MXU in one shot.
    qkv = jnp.dot(xn.astype(bf16), wqkv_ref[...],
                  preferred_element_type=jnp.float32)   # (BT, 3C)

    def heads(off):
        # (BT, 3C) columns [off+h*HS : off+(h+1)*HS] -> (H*B, T, HS).
        # H lane slices + one stack (leading axis) + a leading-dims-only
        # reshape; the slice count no longer scales with batch size.
        hb = jnp.stack(
            [qkv[:, off + h * HS: off + (h + 1) * HS] for h in range(H)],
            axis=0)                                     # (H, BT, HS)
        return hb.reshape(H * B, T, HS).astype(bf16)    # (H*B, T, HS)

    q = heads(0)          # Q columns are pre-scaled by 1/sqrt(HS) at init
    k = heads(C)
    v = heads(2 * C)

    # Head- and batch-batched score matmul + exact f32 softmax.
    s = jnp.einsum("gtd,gsd->gts", q, k,
                   preferred_element_type=jnp.float32)  # (H*B, T, T)
    s = s - jnp.max(s, axis=-1, keepdims=True)
    p = jnp.exp(s)
    p = p / jnp.sum(p, axis=-1, keepdims=True)          # exact normalization
    # Single vectorized store of this layer's maps (bf16 by default).
    wei_ref[...] = p.reshape(H, B, T, T).astype(wei_ref.dtype)

    # (P @ V), then head-concat (== torch.cat(res, dim=-1) column order).
    o = jnp.einsum("gts,gsd->gtd", p.astype(bf16), v,
                   preferred_element_type=jnp.float32)  # (H*B, T, HS)
    o = o.reshape(H, B, T, HS)
    attn = jnp.concatenate([o[h] for h in range(H)], axis=-1)   # (B, T, C)
    attn = attn.reshape(BT, C)

    proj = jnp.dot(attn.astype(bf16), wp_ref[...],
                   preferred_element_type=jnp.float32) + bp

    # ---- residual -> norm2 -> MLP -> residual (dropout p=0.0 => identity) ----
    #   src = norm2(x + attn_proj); out = src + fc2(relu(fc1(src)))
    src = layernorm(x + proj, g2, b2)
    h1 = jnp.maximum(
        jnp.dot(src.astype(bf16), w1_ref[...],
                preferred_element_type=jnp.float32) + bb1, 0.0)
    h2 = jnp.dot(h1.astype(bf16), w2_ref[...],
                 preferred_element_type=jnp.float32) + bb2

    # out_ref is the resident accumulator; HBM writeback happens once,
    # after the last grid step (block index never changes).
    out_ref[...] = src + h2


def encoder_stack_forward(x, params, n_head, *, wei_dtype=jnp.bfloat16):
    """Runs the whole n_layer encoder stack in ONE pallas_call.

    x: (B, T, C) f32.
    Returns (out (B, T, C) f32, wei (L, H, B, T, T) wei_dtype).
    Layer l, head h attention map (B, T, T) == wei[l, h].
    """
    B, T, C = x.shape
    L = params["wqkv"].shape[0]
    H = n_head
    x2 = x.reshape(B * T, C)

    def wspec(shape):
        nd = len(shape)
        # Per-layer block: squeeze the layer axis, indexed by the layer step.
        return pl.BlockSpec((None,) + shape, lambda l: (l,) + (0,) * nd)

    grid_spec = pltpu.PrefetchScalarGridSpec(
        num_scalar_prefetch=0,
        grid=(L,),                              # layers only; weights stream once
        in_specs=[
            pl.BlockSpec((B * T, C), lambda l: (0, 0)),   # x (fetched once)
            wspec((C, 3 * C)),                            # wqkv
            wspec((C, C)),                                # wp
            wspec((C, 4 * C)),                            # w1
            wspec((4 * C, C)),                            # w2
            wspec((6, C)),                                # packed small params
            wspec((1, 4 * C)),                            # fc1 bias
        ],
        out_specs=(
            # Constant block index -> resident accumulator, one HBM writeback.
            pl.BlockSpec((B * T, C), lambda l: (0, 0)),
            # Per-layer attention maps, written back each layer step.
            pl.BlockSpec((None, H, B, T, T), lambda l: (l, 0, 0, 0, 0)),
        ),
    )

    # VMEM limit: physical capacity minus 16 MiB headroom (Mosaic internal
    # scratch / semaphores) -> ~48 MiB on v7x, ~112 MiB on v5e/v6e.
    try:
        vmem_cap = int(pltpu.get_tpu_info().vmem_capacity_bytes)
    except Exception:
        vmem_cap = 64 * 1024 * 1024
    vmem_limit = max(vmem_cap - 16 * 1024 * 1024, 32 * 1024 * 1024)

    out2, wei = pl.pallas_call(
        _encoder_stack_kernel,
        grid_spec=grid_spec,
        out_shape=(
            jax.ShapeDtypeStruct((B * T, C), x.dtype),
            jax.ShapeDtypeStruct((L, H, B, T, T), wei_dtype),
        ),
        compiler_params=pltpu.CompilerParams(
            # Layer axis carries the activation -> sequential.
            # TODO(synk): for v7x megacore with large B*T, add an outer
            # row-tile "parallel" axis so both TensorCores share weight reads.
            dimension_semantics=("arbitrary",),
            vmem_limit_bytes=vmem_limit,
        ),
    )(
        x2,
        params["wqkv"], params["wp"], params["w1"], params["w2"],
        params["pvec"], params["bb1"],
    )
    return out2.reshape(B, T, C), wei


# ----------------------------------------------------------------------------
# EncoderMod glue: embedding lookup + positional encoding (plain JAX).
# ----------------------------------------------------------------------------
def make_positional_encoding(block_size, n_embd):
    position = jnp.arange(block_size, dtype=jnp.float32)[:, None]
    div_term = jnp.exp(
        jnp.arange(0, n_embd, 2, dtype=jnp.float32) * -(math.log(10000.0) / n_embd)
    )
    enc = jnp.zeros((block_size, n_embd), dtype=jnp.float32)
    enc = enc.at[:, 0::2].set(jnp.sin(position * div_term))
    enc = enc.at[:, 1::2].set(jnp.cos(position * div_term))
    return enc                                           # (block_size, n_embd)


def init_params(key, n_layer, n_embd, n_head, vocab_size):
    C = n_embd
    HS = C // n_head
    keys = jax.random.split(key, 1 + n_layer)
    params = {
        "embedding": jax.random.normal(keys[0], (vocab_size, C), jnp.float32) * 0.02
    }
    sc = 1.0 / math.sqrt(C)
    wqkv, wp, w1, w2, pvec, bb1 = ([] for _ in range(6))
    for li in range(n_layer):
        lk = jax.random.split(keys[1 + li], 10)
        # Per-head q/k/v weights concatenated along the output dim
        # (head h = columns [h*HS:(h+1)*HS]), then Q|K|V fused along columns.
        wq = jax.random.normal(lk[0], (C, C), jnp.float32) * sc
        wk = jax.random.normal(lk[1], (C, C), jnp.float32) * sc
        wv = jax.random.normal(lk[2], (C, C), jnp.float32) * sc
        # Fold the 1/sqrt(head_size) attention scale into the Q columns.
        wqkv.append(jnp.concatenate([wq * (1.0 / math.sqrt(HS)), wk, wv], axis=1))
        wp.append(jax.random.normal(lk[3], (C, C), jnp.float32) * sc)
        w1.append(jax.random.normal(lk[4], (C, 4 * C), jnp.float32) * sc)
        w2.append(jax.random.normal(lk[5], (4 * C, C), jnp.float32)
                  * (1.0 / math.sqrt(4 * C)))
        # Packed small params: [norm1 g, norm1 b, norm2 g, norm2 b,
        #                       proj bias, fc2 bias]  -> one (6, C) block.
        pvec.append(jnp.stack([
            1.0 + 0.02 * jax.random.normal(lk[6], (C,), jnp.float32),   # g1
            0.02 * jax.random.normal(lk[7], (C,), jnp.float32),         # b1
            1.0 + 0.02 * jax.random.normal(lk[8], (C,), jnp.float32),   # g2
            0.02 * jax.random.normal(lk[9], (C,), jnp.float32),         # b2
            0.02 * jax.random.normal(lk[3], (C,), jnp.float32),         # proj b
            0.02 * jax.random.normal(lk[5], (C,), jnp.float32),         # fc2 b
        ], axis=0))
        bb1.append(0.02 * jax.random.normal(lk[4], (1, 4 * C), jnp.float32))

    stk = lambda xs, dt: jnp.stack(xs, axis=0).astype(dt)
    params.update(
        # matmul weights stored bf16 (halves DMA; f32 accumulation on MXU)
        # TODO(synk): fp8 storage for wqkv/w1/w2 on v7x (no int path there).
        wqkv=stk(wqkv, jnp.bfloat16), wp=stk(wp, jnp.bfloat16),
        w1=stk(w1, jnp.bfloat16), w2=stk(w2, jnp.bfloat16),
        # layernorm params and biases stay f32 (VPU adds in f32)
        pvec=stk(pvec, jnp.float32), bb1=stk(bb1, jnp.float32),
    )
    return params


@functools.partial(jax.jit, static_argnames=("block_size", "n_head"))
def encoder_mod_forward(params, idx, block_size, n_head):
    """idx: (B, T) int32 token ids. Returns (x, wei) with wei (L, H, B, T, T)."""
    B, T = idx.shape
    C = params["embedding"].shape[1]
    # Embedding gather + positional-encoding add: plain-JAX glue.
    x = jnp.take(params["embedding"], idx, axis=0)            # (B, T, C)
    x = x + make_positional_encoding(block_size, C)[:T][None, :, :]
    return encoder_stack_forward(x, params, n_head)


# ----------------------------------------------------------------------------
# Pure-JAX reference (same bf16-matmul / f32-accumulate recipe) for checking.
# ----------------------------------------------------------------------------
@functools.partial(jax.jit, static_argnames=("block_size", "n_head"))
def encoder_mod_reference(params, idx, block_size, n_head):
    emb = params["embedding"]
    C = emb.shape[1]
    H = n_head
    HS = C // H
    bf16 = jnp.bfloat16
    B, T = idx.shape

    x = jnp.take(emb, idx, axis=0)
    x = x + make_positional_encoding(block_size, C)[:T][None, :, :]

    def ln(v, g, b):
        mu = jnp.mean(v, axis=-1, keepdims=True)
        var = jnp.mean(jnp.square(v - mu), axis=-1, keepdims=True)
        return (v - mu) * jax.lax.rsqrt(var + 1e-5) * g + b

    L = params["wqkv"].shape[0]
    weis = []
    for l in range(L):
        pv = params["pvec"][l]
        g1, b1, g2, b2, bp, bb2 = pv[0], pv[1], pv[2], pv[3], pv[4], pv[5]
        bb1 = params["bb1"][l, 0]
        xn = ln(x, g1, b1)
        qkv = jnp.einsum("btc,cf->btf", xn.astype(bf16), params["wqkv"][l],
                         preferred_element_type=jnp.float32)
        q = qkv[..., :C].reshape(B, T, H, HS).astype(bf16)   # scale pre-folded
        k = qkv[..., C:2 * C].reshape(B, T, H, HS).astype(bf16)
        v = qkv[..., 2 * C:].reshape(B, T, H, HS).astype(bf16)
        s = jnp.einsum("bthd,bshd->bhts", q, k,
                       preferred_element_type=jnp.float32)
        w = jax.nn.softmax(s, axis=-1)                          # (B, H, T, T)
        o = jnp.einsum("bhts,bshd->bthd", w.astype(bf16), v,
                       preferred_element_type=jnp.float32).reshape(B, T, C)
        proj = jnp.einsum("btc,cd->btd", o.astype(bf16), params["wp"][l],
                          preferred_element_type=jnp.float32) + bp
        src = ln(x + proj, g2, b2)
        h1 = jax.nn.relu(
            jnp.einsum("btc,cf->btf", src.astype(bf16), params["w1"][l],
                       preferred_element_type=jnp.float32) + bb1)
        h2 = jnp.einsum("btf,fc->btc", h1.astype(bf16), params["w2"][l],
                        preferred_element_type=jnp.float32) + bb2
        x = src + h2
        weis.append(jnp.transpose(w, (1, 0, 2, 3)))             # (H, B, T, T)
    return x, jnp.stack(weis, axis=0)                           # (L, H, B, T, T)


if __name__ == "__main__":
    # small shapes consistent with the module
    n_layer, n_embd, n_head = 2, 32, 4
    vocab_size, block_size = 64, 16
    B, T = 2, 8

    key = jax.random.PRNGKey(0)
    pkey, ikey = jax.random.split(key)
    params = init_params(pkey, n_layer, n_embd, n_head, vocab_size)
    idx = jax.random.randint(ikey, (B, T), 0, vocab_size, dtype=jnp.int32)

    out, wei = encoder_mod_forward(params, idx, block_size, n_head)
    out = jax.block_until_ready(out)
    wei = jax.block_until_ready(wei)

    assert out.shape == (B, T, n_embd)
    assert wei.shape == (n_layer, n_head, B, T, T)
    assert bool(jnp.all(jnp.isfinite(out)))
    # softmax rows sum to ~1 (exact f32 normalization, then bf16 storage)
    wei_f32 = wei.astype(jnp.float32)
    assert bool(jnp.allclose(jnp.sum(wei_f32, axis=-1), 1.0, atol=2e-2))

    # compare against the pure-JAX reference using the same bf16/f32 recipe
    ref_out, ref_wei = encoder_mod_reference(params, idx, block_size, n_head)
    assert bool(jnp.allclose(out, ref_out, atol=5e-2, rtol=5e-2))
    assert bool(jnp.allclose(wei_f32, ref_wei, atol=2e-2))

    # PyTorch-shaped list of per-head (B, T, T) maps (layer-major, then head),
    # built host-side only, outside the jitted forward.
    weights = [wei[l, h] for l in range(n_layer) for h in range(n_head)]
    assert len(weights) == n_layer * n_head
    assert all(w.shape == (B, T, T) for w in weights)

    print("KERNEL_OK")
</pallas_src>

<mosaic_0001>
module attributes {stable_mosaic.version = 11 : i64} {
  func.func @_encoder_stack_kernel(%arg0: i32, %arg1: memref<16x32xf32, #tpu.memory_space<vmem>>, %arg2: memref<1x32x96xbf16, #tpu.memory_space<vmem>>, %arg3: memref<1x32x32xbf16, #tpu.memory_space<vmem>>, %arg4: memref<1x32x128xbf16, #tpu.memory_space<vmem>>, %arg5: memref<1x128x32xbf16, #tpu.memory_space<vmem>>, %arg6: memref<1x6x32xf32, #tpu.memory_space<vmem>>, %arg7: memref<1x1x128xf32, #tpu.memory_space<vmem>>, %arg8: memref<16x32xf32, #tpu.memory_space<vmem>>, %arg9: memref<1x4x2x8x8xbf16, #tpu.memory_space<vmem>>) attributes {dimension_semantics = [#tpu.dimension_semantics<arbitrary>], iteration_bounds = array<i64: 2>, scalar_prefetch = 0 : i64, scratch_operands = 0 : i64, tpu.core_type = #tpu.core_type<tc>, window_params = [{pipeline_mode = #tpu.pipeline_mode<synchronous>, transform_indices = @transform_0, window_bounds = array<i64: 16, 32>}, {transform_indices = @transform_1, window_bounds = array<i64: 1, 32, 96>}, {transform_indices = @transform_2, window_bounds = array<i64: 1, 32, 32>}, {transform_indices = @transform_3, window_bounds = array<i64: 1, 32, 128>}, {transform_indices = @transform_4, window_bounds = array<i64: 1, 128, 32>}, {transform_indices = @transform_5, window_bounds = array<i64: 1, 6, 32>}, {transform_indices = @transform_6, window_bounds = array<i64: 1, 1, 128>}, {pipeline_mode = #tpu.pipeline_mode<synchronous>, transform_indices = @transform_7, window_bounds = array<i64: 16, 32>}, {transform_indices = @transform_8, window_bounds = array<i64: 1, 4, 2, 8, 8>}]} {
    %c0_i32 = arith.constant 0 : i32
    %0 = arith.cmpi eq, %arg0, %c0_i32 : i32
    %1 = arith.extui %0 : i1 to i32
    %c0_i32_0 = arith.constant 0 : i32
    %2 = arith.cmpi ne, %1, %c0_i32_0 : i32
    scf.if %2 {
      %c0_55 = arith.constant 0 : index
      %c0_56 = arith.constant 0 : index
      %150 = vector.load %arg1[%c0_55, %c0_56] : memref<16x32xf32, #tpu.memory_space<vmem>>, vector<16x32xf32>
      %c0_57 = arith.constant 0 : index
      %c0_58 = arith.constant 0 : index
      %151 = vector.load %arg8[%c0_57, %c0_58] : memref<16x32xf32, #tpu.memory_space<vmem>>, vector<16x32xf32>
      tpu.vector_store %arg8[%c0_57, %c0_58], %150 {strides = array<i32>} : memref<16x32xf32, #tpu.memory_space<vmem>>, vector<16x32xf32>,
    } else {
    }
    %c0 = arith.constant 0 : index
    %c0_1 = arith.constant 0 : index
    %3 = vector.load %arg8[%c0, %c0_1] : memref<16x32xf32, #tpu.memory_space<vmem>>, vector<16x32xf32>
    %c0_2 = arith.constant 0 : index
    %c0_3 = arith.constant 0 : index
    %c0_4 = arith.constant 0 : index
    %4 = vector.load %arg6[%c0_2, %c0_3, %c0_4] : memref<1x6x32xf32, #tpu.memory_space<vmem>>, vector<1x1x32xf32>
    %5 = vector.shape_cast %4 : vector<1x1x32xf32> to vector<1x32xf32>
    %c0_5 = arith.constant 0 : index
    %c1 = arith.constant 1 : index
    %c0_6 = arith.constant 0 : index
    %6 = vector.load %arg6[%c0_5, %c1, %c0_6] : memref<1x6x32xf32, #tpu.memory_space<vmem>>, vector<1x1x32xf32>
    %7 = vector.shape_cast %6 : vector<1x1x32xf32> to vector<1x32xf32>
    %c0_7 = arith.constant 0 : index
    %c2 = arith.constant 2 : index
    %c0_8 = arith.constant 0 : index
    %8 = vector.load %arg6[%c0_7, %c2, %c0_8] : memref<1x6x32xf32, #tpu.memory_space<vmem>>, vector<1x1x32xf32>
    %9 = vector.shape_cast %8 : vector<1x1x32xf32> to vector<1x32xf32>
    %c0_9 = arith.constant 0 : index
    %c3 = arith.constant 3 : index
    %c0_10 = arith.constant 0 : index
    %10 = vector.load %arg6[%c0_9, %c3, %c0_10] : memref<1x6x32xf32, #tpu.memory_space<vmem>>, vector<1x1x32xf32>
    %11 = vector.shape_cast %10 : vector<1x1x32xf32> to vector<1x32xf32>
    %c0_11 = arith.constant 0 : index
    %c4 = arith.constant 4 : index
    %c0_12 = arith.constant 0 : index
    %12 = vector.load %arg6[%c0_11, %c4, %c0_12] : memref<1x6x32xf32, #tpu.memory_space<vmem>>, vector<1x1x32xf32>
    %13 = vector.shape_cast %12 : vector<1x1x32xf32> to vector<1x32xf32>
    %c0_13 = arith.constant 0 : index
    %c5 = arith.constant 5 : index
    %c0_14 = arith.constant 0 : index
    %14 = vector.load %arg6[%c0_13, %c5, %c0_14] : memref<1x6x32xf32, #tpu.memory_space<vmem>>, vector<1x1x32xf32>
    %15 = vector.shape_cast %14 : vector<1x1x32xf32> to vector<1x32xf32>
    %c0_15 = arith.constant 0 : index
    %c0_16 = arith.constant 0 : index
    %c0_17 = arith.constant 0 : index
    %16 = vector.load %arg7[%c0_15, %c0_16, %c0_17] : memref<1x1x128xf32, #tpu.memory_space<vmem>>, vector<1x1x128xf32>
    %17 = vector.shape_cast %16 : vector<1x1x128xf32> to vector<1x128xf32>
    %cst = arith.constant dense<0.000000e+00> : vector<16xf32>
    %18 = vector.multi_reduction <add>, %3, %cst [1] : vector<16x32xf32> to vector<16xf32>
    %19 = vector.shape_cast %18 : vector<16xf32> to vector<16x1xf32>
    %cst_18 = arith.constant 3.200000e+01 : f32
    %20 = vector.broadcast %cst_18 : f32 to vector<16x1xf32>
    %21 = arith.divf %19, %20 : vector<16x1xf32>
    %22 = vector.broadcast %21 : vector<16x1xf32> to vector<16x32xf32>
    %23 = arith.subf %3, %22 : vector<16x32xf32>
    %24 = arith.mulf %23, %23 : vector<16x32xf32>
    %cst_19 = arith.constant dense<0.000000e+00> : vector<16xf32>
    %25 = vector.multi_reduction <add>, %24, %cst_19 [1] : vector<16x32xf32> to vector<16xf32>
    %26 = vector.shape_cast %25 : vector<16xf32> to vector<16x1xf32>
    %cst_20 = arith.constant 3.200000e+01 : f32
    %27 = vector.broadcast %cst_20 : f32 to vector<16x1xf32>
    %28 = arith.divf %26, %27 : vector<16x1xf32>
    %29 = vector.broadcast %21 : vector<16x1xf32> to vector<16x32xf32>
    %30 = arith.subf %3, %29 : vector<16x32xf32>
    %cst_21 = arith.constant 9.99999974E-6 : f32
    %31 = vector.broadcast %cst_21 : f32 to vector<16x1xf32>
    %32 = arith.addf %28, %31 : vector<16x1xf32>
    %33 = math.rsqrt %32 : vector<16x1xf32>
    %34 = vector.broadcast %33 : vector<16x1xf32> to vector<16x32xf32>
    %35 = arith.mulf %30, %34 : vector<16x32xf32>
    %36 = vector.broadcast %5 : vector<1x32xf32> to vector<16x32xf32>
    %37 = arith.mulf %35, %36 : vector<16x32xf32>
    %38 = vector.broadcast %7 : vector<1x32xf32> to vector<16x32xf32>
    %39 = arith.addf %37, %38 : vector<16x32xf32>
    %40 = arith.truncf %39 : vector<16x32xf32> to vector<16x32xbf16>
    %c0_22 = arith.constant 0 : index
    %c0_23 = arith.constant 0 : index
    %c0_24 = arith.constant 0 : index
    %41 = vector.load %arg2[%c0_22, %c0_23, %c0_24] : memref<1x32x96xbf16, #tpu.memory_space<vmem>>, vector<1x32x96xbf16>
    %42 = vector.shape_cast %41 : vector<1x32x96xbf16> to vector<32x96xbf16>
    %cst_25 = arith.constant dense<0.000000e+00> : vector<16x96xf32>
    %43 = tpu.matmul %40, %42, %cst_25 {dimension_numbers = #tpu.dot_dimension_numbers<[1], [0], [0], [1], [0, 0, 1, 1], [], []>} : vector<16x32xbf16>, vector<32x96xbf16>, vector<16x96xf32> -> vector<16x96xf32>
    %44 = vector.extract_strided_slice %43 {offsets = [0, 0], sizes = [16, 8], strides = [1, 1]} : vector<16x96xf32> to vector<16x8xf32>
    %45 = vector.extract_strided_slice %43 {offsets = [0, 8], sizes = [16, 8], strides = [1, 1]} : vector<16x96xf32> to vector<16x8xf32>
    %46 = vector.extract_strided_slice %43 {offsets = [0, 16], sizes = [16, 8], strides = [1, 1]} : vector<16x96xf32> to vector<16x8xf32>
    %47 = vector.extract_strided_slice %43 {offsets = [0, 24], sizes = [16, 8], strides = [1, 1]} : vector<16x96xf32> to vector<16x8xf32>
    %48 = vector.shape_cast %44 : vector<16x8xf32> to vector<1x16x8xf32>
    %49 = vector.shape_cast %45 : vector<16x8xf32> to vector<1x16x8xf32>
    %50 = vector.shape_cast %46 : vector<16x8xf32> to vector<1x16x8xf32>
    %51 = vector.shape_cast %47 : vector<16x8xf32> to vector<1x16x8xf32>
    %52 = tpu.concatenate %48, %49, %50, %51 in 0 : vector<1x16x8xf32>, vector<1x16x8xf32>, vector<1x16x8xf32>, vector<1x16x8xf32> -> vector<4x16x8xf32>
    %53 = vector.shape_cast %52 : vector<4x16x8xf32> to vector<8x8x8xf32>
    %54 = arith.truncf %53 : vector<8x8x8xf32> to vector<8x8x8xbf16>
    %55 = vector.extract_strided_slice %43 {offsets = [0, 32], sizes = [16, 8], strides = [1, 1]} : vector<16x96xf32> to vector<16x8xf32>
    %56 = vector.extract_strided_slice %43 {offsets = [0, 40], sizes = [16, 8], strides = [1, 1]} : vector<16x96xf32> to vector<16x8xf32>
    %57 = vector.extract_strided_slice %43 {offsets = [0, 48], sizes = [16, 8], strides = [1, 1]} : vector<16x96xf32> to vector<16x8xf32>
    %58 = vector.extract_strided_slice %43 {offsets = [0, 56], sizes = [16, 8], strides = [1, 1]} : vector<16x96xf32> to vector<16x8xf32>
    %59 = vector.shape_cast %55 : vector<16x8xf32> to vector<1x16x8xf32>
    %60 = vector.shape_cast %56 : vector<16x8xf32> to vector<1x16x8xf32>
    %61 = vector.shape_cast %57 : vector<16x8xf32> to vector<1x16x8xf32>
    %62 = vector.shape_cast %58 : vector<16x8xf32> to vector<1x16x8xf32>
    %63 = tpu.concatenate %59, %60, %61, %62 in 0 : vector<1x16x8xf32>, vector<1x16x8xf32>, vector<1x16x8xf32>, vector<1x16x8xf32> -> vector<4x16x8xf32>
    %64 = vector.shape_cast %63 : vector<4x16x8xf32> to vector<8x8x8xf32>
    %65 = arith.truncf %64 : vector<8x8x8xf32> to vector<8x8x8xbf16>
    %66 = vector.extract_strided_slice %43 {offsets = [0, 64], sizes = [16, 8], strides = [1, 1]} : vector<16x96xf32> to vector<16x8xf32>
    %67 = vector.extract_strided_slice %43 {offsets = [0, 72], sizes = [16, 8], strides = [1, 1]} : vector<16x96xf32> to vector<16x8xf32>
    %68 = vector.extract_strided_slice %43 {offsets = [0, 80], sizes = [16, 8], strides = [1, 1]} : vector<16x96xf32> to vector<16x8xf32>
    %69 = vector.extract_strided_slice %43 {offsets = [0, 88], sizes = [16, 8], strides = [1, 1]} : vector<16x96xf32> to vector<16x8xf32>
    %70 = vector.shape_cast %66 : vector<16x8xf32> to vector<1x16x8xf32>
    %71 = vector.shape_cast %67 : vector<16x8xf32> to vector<1x16x8xf32>
    %72 = vector.shape_cast %68 : vector<16x8xf32> to vector<1x16x8xf32>
    %73 = vector.shape_cast %69 : vector<16x8xf32> to vector<1x16x8xf32>
    %74 = tpu.concatenate %70, %71, %72, %73 in 0 : vector<1x16x8xf32>, vector<1x16x8xf32>, vector<1x16x8xf32>, vector<1x16x8xf32> -> vector<4x16x8xf32>
    %75 = vector.shape_cast %74 : vector<4x16x8xf32> to vector<8x8x8xf32>
    %76 = arith.truncf %75 : vector<8x8x8xf32> to vector<8x8x8xbf16>
    "tpu.trace_start"() <{level = 10 : i32, message = "gtd,gsd->gts"}> : () -> ()
    %cst_26 = arith.constant dense<0.000000e+00> : vector<8x8x8xf32>
    %77 = tpu.matmul %54, %65, %cst_26 {dimension_numbers = #tpu.dot_dimension_numbers<[2], [2], [1], [1], [0, 0, 0, 1, 1, 1], [0], [0]>} : vector<8x8x8xbf16>, vector<8x8x8xbf16>, vector<8x8x8xf32> -> vector<8x8x8xf32>
    "tpu.trace_stop"() : () -> ()
    %cst_27 = arith.constant dense<0xFF800000> : vector<8x8xf32>
    %78 = vector.multi_reduction <maximumf>, %77, %cst_27 [2] : vector<8x8x8xf32> to vector<8x8xf32>
    %79 = vector.shape_cast %78 : vector<8x8xf32> to vector<8x8x1xf32>
    %80 = vector.broadcast %79 : vector<8x8x1xf32> to vector<8x8x8xf32>
    %81 = arith.subf %77, %80 : vector<8x8x8xf32>
    %82 = math.exp %81 : vector<8x8x8xf32>
    %cst_28 = arith.constant dense<0.000000e+00> : vector<8x8xf32>
    %83 = vector.multi_reduction <add>, %82, %cst_28 [2] : vector<8x8x8xf32> to vector<8x8xf32>
    %84 = vector.shape_cast %83 : vector<8x8xf32> to vector<8x8x1xf32>
    %85 = vector.broadcast %84 : vector<8x8x1xf32> to vector<8x8x8xf32>
    %86 = arith.divf %82, %85 : vector<8x8x8xf32>
    %87 = vector.shape_cast %86 : vector<8x8x8xf32> to vector<4x2x8x8xf32>
    %88 = arith.truncf %87 : vector<4x2x8x8xf32> to vector<4x2x8x8xbf16>
    %c0_29 = arith.constant 0 : index
    %c0_30 = arith.constant 0 : index
    %c0_31 = arith.constant 0 : index
    %c0_32 = arith.constant 0 : index
    %c0_33 = arith.constant 0 : index
    %89 = vector.load %arg9[%c0_29, %c0_30, %c0_31, %c0_32, %c0_33] : memref<1x4x2x8x8xbf16, #tpu.memory_space<vmem>>, vector<1x4x2x8x8xbf16>
    %90 = vector.shape_cast %89 : vector<1x4x2x8x8xbf16> to vector<4x2x8x8xbf16>
    %91 = vector.shape_cast %88 : vector<4x2x8x8xbf16> to vector<1x4x2x8x8xbf16>
    tpu.vector_store %arg9[%c0_29, %c0_30, %c0_31, %c0_32, %c0_33], %91 {strides = array<i32>} : memref<1x4x2x8x8xbf16, #tpu.memory_space<vmem>>, vector<1x4x2x8x8xbf16>,
    %92 = arith.truncf %86 : vector<8x8x8xf32> to vector<8x8x8xbf16>
    "tpu.trace_start"() <{level = 10 : i32, message = "gts,gsd->gtd"}> : () -> ()
    %cst_34 = arith.constant dense<0.000000e+00> : vector<8x8x8xf32>
    %93 = tpu.matmul %92, %76, %cst_34 {dimension_numbers = #tpu.dot_dimension_numbers<[2], [1], [1], [2], [0, 0, 0, 1, 1, 2], [0], [0]>} : vector<8x8x8xbf16>, vector<8x8x8xbf16>, vector<8x8x8xf32> -> vector<8x8x8xf32>
    "tpu.trace_stop"() : () -> ()
    %94 = vector.shape_cast %93 : vector<8x8x8xf32> to vector<4x2x8x8xf32>
    %95 = vector.extract_strided_slice %94 {offsets = [0, 0, 0, 0], sizes = [1, 2, 8, 8], strides = [1, 1, 1, 1]} : vector<4x2x8x8xf32> to vector<1x2x8x8xf32>
    %96 = vector.shape_cast %95 : vector<1x2x8x8xf32> to vector<2x8x8xf32>
    %97 = vector.extract_strided_slice %94 {offsets = [1, 0, 0, 0], sizes = [1, 2, 8, 8], strides = [1, 1, 1, 1]} : vector<4x2x8x8xf32> to vector<1x2x8x8xf32>
    %98 = vector.shape_cast %97 : vector<1x2x8x8xf32> to vector<2x8x8xf32>
    %99 = vector.extract_strided_slice %94 {offsets = [2, 0, 0, 0], sizes = [1, 2, 8, 8], strides = [1, 1, 1, 1]} : vector<4x2x8x8xf32> to vector<1x2x8x8xf32>
    %100 = vector.shape_cast %99 : vector<1x2x8x8xf32> to vector<2x8x8xf32>
    %101 = vector.extract_strided_slice %94 {offsets = [3, 0, 0, 0], sizes = [1, 2, 8, 8], strides = [1, 1, 1, 1]} : vector<4x2x8x8xf32> to vector<1x2x8x8xf32>
    %102 = vector.shape_cast %101 : vector<1x2x8x8xf32> to vector<2x8x8xf32>
    %103 = tpu.concatenate %96, %98, %100, %102 in 2 : vector<2x8x8xf32>, vector<2x8x8xf32>, vector<2x8x8xf32>, vector<2x8x8xf32> -> vector<2x8x32xf32>
    %104 = vector.shape_cast %103 : vector<2x8x32xf32> to vector<16x32xf32>
    %105 = arith.truncf %104 : vector<16x32xf32> to vector<16x32xbf16>
    %c0_35 = arith.constant 0 : index
    %c0_36 = arith.constant 0 : index
    %c0_37 = arith.constant 0 : index
    %106 = vector.load %arg3[%c0_35, %c0_36, %c0_37] : memref<1x32x32xbf16, #tpu.memory_space<vmem>>, vector<1x32x32xbf16>
    %107 = vector.shape_cast %106 : vector<1x32x32xbf16> to vector<32x32xbf16>
    %cst_38 = arith.constant dense<0.000000e+00> : vector<16x32xf32>
    %108 = tpu.matmul %105, %107, %cst_38 {dimension_numbers = #tpu.dot_dimension_numbers<[1], [0], [0], [1], [0, 0, 1, 1], [], []>} : vector<16x32xbf16>, vector<32x32xbf16>, vector<16x32xf32> -> vector<16x32xf32>
    %109 = vector.broadcast %13 : vector<1x32xf32> to vector<16x32xf32>
    %110 = arith.addf %108, %109 : vector<16x32xf32>
    %111 = arith.addf %3, %110 : vector<16x32xf32>
    %cst_39 = arith.constant dense<0.000000e+00> : vector<16xf32>
    %112 = vector.multi_reduction <add>, %111, %cst_39 [1] : vector<16x32xf32> to vector<16xf32>
    %113 = vector.shape_cast %112 : vector<16xf32> to vector<16x1xf32>
    %cst_40 = arith.constant 3.200000e+01 : f32
    %114 = vector.broadcast %cst_40 : f32 to vector<16x1xf32>
    %115 = arith.divf %113, %114 : vector<16x1xf32>
    %116 = vector.broadcast %115 : vector<16x1xf32> to vector<16x32xf32>
    %117 = arith.subf %111, %116 : vector<16x32xf32>
    %118 = arith.mulf %117, %117 : vector<16x32xf32>
    %cst_41 = arith.constant dense<0.000000e+00> : vector<16xf32>
    %119 = vector.multi_reduction <add>, %118, %cst_41 [1] : vector<16x32xf32> to vector<16xf32>
    %120 = vector.shape_cast %119 : vector<16xf32> to vector<16x1xf32>
    %cst_42 = arith.constant 3.200000e+01 : f32
    %121 = vector.broadcast %cst_42 : f32 to vector<16x1xf32>
    %122 = arith.divf %120, %121 : vector<16x1xf32>
    %123 = vector.broadcast %115 : vector<16x1xf32> to vector<16x32xf32>
    %124 = arith.subf %111, %123 : vector<16x32xf32>
    %cst_43 = arith.constant 9.99999974E-6 : f32
    %125 = vector.broadcast %cst_43 : f32 to vector<16x1xf32>
    %126 = arith.addf %122, %125 : vector<16x1xf32>
    %127 = math.rsqrt %126 : vector<16x1xf32>
    %128 = vector.broadcast %127 : vector<16x1xf32> to vector<16x32xf32>
    %129 = arith.mulf %124, %128 : vector<16x32xf32>
    %130 = vector.broadcast %9 : vector<1x32xf32> to vector<16x32xf32>
    %131 = arith.mulf %129, %130 : vector<16x32xf32>
    %132 = vector.broadcast %11 : vector<1x32xf32> to vector<16x32xf32>
    %133 = arith.addf %131, %132 : vector<16x32xf32>
    %134 = arith.truncf %133 : vector<16x32xf32> to vector<16x32xbf16>
    %c0_44 = arith.constant 0 : index
    %c0_45 = arith.constant 0 : index
    %c0_46 = arith.constant 0 : index
    %135 = vector.load %arg4[%c0_44, %c0_45, %c0_46] : memref<1x32x128xbf16, #tpu.memory_space<vmem>>, vector<1x32x128xbf16>
    %136 = vector.shape_cast %135 : vector<1x32x128xbf16> to vector<32x128xbf16>
    %cst_47 = arith.constant dense<0.000000e+00> : vector<16x128xf32>
    %137 = tpu.matmul %134, %136, %cst_47 {dimension_numbers = #tpu.dot_dimension_numbers<[1], [0], [0], [1], [0, 0, 1, 1], [], []>} : vector<16x32xbf16>, vector<32x128xbf16>, vector<16x128xf32> -> vector<16x128xf32>
    %138 = vector.broadcast %17 : vector<1x128xf32> to vector<16x128xf32>
    %139 = arith.addf %137, %138 : vector<16x128xf32>
    %cst_48 = arith.constant 0.000000e+00 : f32
    %140 = vector.broadcast %cst_48 : f32 to vector<16x128xf32>
    %141 = arith.maximumf %139, %140 : vector<16x128xf32>
    %142 = arith.truncf %141 : vector<16x128xf32> to vector<16x128xbf16>
    %c0_49 = arith.constant 0 : index
    %c0_50 = arith.constant 0 : index
    %c0_51 = arith.constant 0 : index
    %143 = vector.load %arg5[%c0_49, %c0_50, %c0_51] : memref<1x128x32xbf16, #tpu.memory_space<vmem>>, vector<1x128x32xbf16>
    %144 = vector.shape_cast %143 : vector<1x128x32xbf16> to vector<128x32xbf16>
    %cst_52 = arith.constant dense<0.000000e+00> : vector<16x32xf32>
    %145 = tpu.matmul %142, %144, %cst_52 {dimension_numbers = #tpu.dot_dimension_numbers<[1], [0], [0], [1], [0, 0, 1, 1], [], []>} : vector<16x128xbf16>, vector<128x32xbf16>, vector<16x32xf32> -> vector<16x32xf32>
    %146 = vector.broadcast %15 : vector<1x32xf32> to vector<16x32xf32>
    %147 = arith.addf %145, %146 : vector<16x32xf32>
    %148 = arith.addf %133, %147 : vector<16x32xf32>
    %c0_53 = arith.constant 0 : index
    %c0_54 = arith.constant 0 : index
    %149 = vector.load %arg8[%c0_53, %c0_54] : memref<16x32xf32, #tpu.memory_space<vmem>>, vector<16x32xf32>
    tpu.vector_store %arg8[%c0_53, %c0_54], %148 {strides = array<i32>} : memref<16x32xf32, #tpu.memory_space<vmem>>, vector<16x32xf32>,
    return
  }
  func.func @transform_0(%arg0: i32) -> (i32, i32) {
    %c0_i32 = arith.constant 0 : i32
    %c0_i32_0 = arith.constant 0 : i32
    %c0_i32_1 = arith.constant 0 : i32
    return %c0_i32, %c0_i32_0 : i32, i32
  }
  func.func @transform_1(%arg0: i32) -> (i32, i32, i32) {
    %c0_i32 = arith.constant 0 : i32
    %c0_i32_0 = arith.constant 0 : i32
    %c0_i32_1 = arith.constant 0 : i32
    return %arg0, %c0_i32, %c0_i32_0 : i32, i32, i32
  }
  func.func @transform_2(%arg0: i32) -> (i32, i32, i32) {
    %c0_i32 = arith.constant 0 : i32
    %c0_i32_0 = arith.constant 0 : i32
    %c0_i32_1 = arith.constant 0 : i32
    return %arg0, %c0_i32, %c0_i32_0 : i32, i32, i32
  }
  func.func @transform_3(%arg0: i32) -> (i32, i32, i32) {
    %c0_i32 = arith.constant 0 : i32
    %c0_i32_0 = arith.constant 0 : i32
    %c0_i32_1 = arith.constant 0 : i32
    return %arg0, %c0_i32, %c0_i32_0 : i32, i32, i32
  }
  func.func @transform_4(%arg0: i32) -> (i32, i32, i32) {
    %c0_i32 = arith.constant 0 : i32
    %c0_i32_0 = arith.constant 0 : i32
    %c0_i32_1 = arith.constant 0 : i32
    return %arg0, %c0_i32, %c0_i32_0 : i32, i32, i32
  }
  func.func @transform_5(%arg0: i32) -> (i32, i32, i32) {
    %c0_i32 = arith.constant 0 : i32
    %c0_i32_0 = arith.constant 0 : i32
    %c0_i32_1 = arith.constant 0 : i32
    return %arg0, %c0_i32, %c0_i32_0 : i32, i32, i32
  }
  func.func @transform_6(%arg0: i32) -> (i32, i32, i32) {
    %c0_i32 = arith.constant 0 : i32
    %c0_i32_0 = arith.constant 0 : i32
    %c0_i32_1 = arith.constant 0 : i32
    return %arg0, %c0_i32, %c0_i32_0 : i32, i32, i32
  }
  func.func @transform_7(%arg0: i32) -> (i32, i32) {
    %c0_i32 = arith.constant 0 : i32
    %c0_i32_0 = arith.constant 0 : i32
    %c0_i32_1 = arith.constant 0 : i32
    return %c0_i32, %c0_i32_0 : i32, i32
  }
  func.func @transform_8(%arg0: i32) -> (i32, i32, i32, i32, i32) {
    %c0_i32 = arith.constant 0 : i32
    %c0_i32_0 = arith.constant 0 : i32
    %c0_i32_1 = arith.constant 0 : i32
    %c0_i32_2 = arith.constant 0 : i32
    %c0_i32_3 = arith.constant 0 : i32
    return %arg0, %c0_i32, %c0_i32_0, %c0_i32_1, %c0_i32_2 : i32, i32, i32, i32, i32
  }
}

</mosaic_0001>

<llo_original>
// kernel: encoder_mod_forward.1
$region0: #{encoder_mod_forward.1}
  #allocation0 [shape = 'u32[]', space=smem, size = 0x4, offset = 0x4, fixed_abs, tag = 'smem constant byte address 0x4 - core index']
  #allocation1 [shape = 'u32[144,128]{1,0:T(1,128)}', space=vmem, size = 0x12000, scoped, tag = 'internal scratch']
  %s0 = inlined_call_operand.vmem [shape: f32[16,32], index: 0, kind: input, shape index: {}]
  %s1 = inlined_call_operand.vmem [shape: bf16[2,32,96], index: 1, kind: input, shape index: {}]
  %s2 = inlined_call_operand.vmem [shape: bf16[2,32,32], index: 2, kind: input, shape index: {}]
  %s3 = inlined_call_operand.vmem [shape: bf16[2,32,128], index: 3, kind: input, shape index: {}]
  %s4 = inlined_call_operand.vmem [shape: bf16[2,128,32], index: 4, kind: input, shape index: {}]
  %s5 = inlined_call_operand.vmem [shape: f32[2,6,32], index: 5, kind: input, shape index: {}]
  %s6 = inlined_call_operand.vmem [shape: f32[2,1,128], index: 6, kind: input, shape index: {}]
  %s7 = inlined_call_operand.hbm [shape: f32[16,32], index: 7, kind: output, shape index: {0}]
  %s8 = inlined_call_operand.hbm [shape: bf16[2,4,2,8,8], index: 8, kind: output, shape index: {1}]
  %9 = xla_tuple %s7, %s8
  %s10 = sld [smem:[#allocation0]]
  $region73: #{encoder_mod_forward.1} parent=0
    _
  %s12 = ssub.s32 1, %s10
  %s13 = scalar_select 0, %s12, %s10
  $region1: #{encoder_mod_forward.1} parent=0
    #allocation2 [shape = 'u8[8192]{0}', space=vmem, size = 0x2000, scoped, tag = 'output window, operand 0, single buffered']
    #allocation3 [shape = 's32[2]{0}', space=sflag, size = 0x8, scoped, tag = 'scoped memory for encoder_mod_forward.1']
    #allocation4 [shape = 'u8[32768]{0}', space=vmem, size = 0x8000, scoped, tag = 'output window, operand 1']
    #allocation5 [shape = 's32[2]{0}', space=sflag, size = 0x8, scoped, tag = 'scoped memory for encoder_mod_forward.1']
    %14 = vsyncpa [#allocation3], 0
    %15 = vsyncpa [#allocation5], 0
    %s16 = scalar_lea.sflag [#allocation5], 1
    %17 = vsyncpa %s16, 0
    loop: start=0, step=1, limit=4
    $region2: #{encoder_mod_forward.1} parent=1 // loop_pre_header
      _
    $region3: #{encoder_mod_forward.1} parent=1 // loop_header
      %s19 = sphi 0, %s23
      %p20 = scmp.ge.s32.totalorder %s19, 4
      %s27 = sphi 0, %s27
      %s29 = sphi 0, %s27
      %s30 = sphi 0, %s29
      %s44 = sphi 0, %s30
      %s50 = sphi 0, %s52
      %s53 = sphi 0, %s50
      %s54 = sphi 0, %s53
      %s70 = sphi 0, %s54
      %s76 = sphi 0, %s78
      %s79 = sphi 0, %s76
      %s80 = sphi 0, %s79
      %s96 = sphi 0, %s80
      %s102 = sphi 0, %s104
      %s105 = sphi 0, %s102
      %s106 = sphi 0, %s105
      %s122 = sphi 0, %s106
      %s128 = sphi 0, %s130
      %s131 = sphi 0, %s128
      %s132 = sphi 0, %s131
      %s148 = sphi 0, %s132
      %s154 = sphi 0, %s156
      %s157 = sphi 0, %s154
      %s158 = sphi 0, %s157
      %s174 = sphi 0, %s158
      %s180 = sphi 0, %s182
      %s183 = sphi 0, %s180
      %s184 = sphi 0, %s183
      %s200 = sphi 0, %s184
      %s204 = sphi 0, %s204
      %s206 = sphi 0, %s204
      %s207 = sphi 0, %s206
      %s221 = sphi 0, %s207
      %s227 = sphi 0, %s229
      %s230 = sphi 0, %s227
      %s231 = sphi 0, %s230
      %s247 = sphi 0, %s231
    $region4: #{encoder_mod_forward.1} parent=1 // loop_header_branch
      %22 = sbr.rel (%p20) target = $region8
    $region5: #{encoder_mod_forward.1} parent=1 // loop_body
      %s24 = ssub.s32 %s19, 1
      %s25 = ssub.s32 %s19, 2
      %s26 = sadd.s32 %s19, 1
      %s28 = sadd.s32 %s27, 1
      %p31 = scmp.eq.s32.totalorder %s19, 1
      %p32 = scmp.ne.s32.totalorder %s27, %s29
      %p33 = scmp.eq.s32.totalorder %s19, 0
      %p34 = por %p32, %p33
      %p35 = scmp.ne.s32.totalorder %s27, %s29
      %p36 = scmp.eq.s32.totalorder %s24, 1
      %p37 = por %p35, %p36
      %p38 = scmp.ne.s32.totalorder %s29, %s30
      %p39 = scmp.eq.s32.totalorder %s24, 0
      %p40 = por %p38, %p39
      %p41 = scmp.ne.s32.totalorder %s29, %s30
      %p42 = scmp.eq.s32.totalorder %s25, 1
      %p43 = por %p41, %p42
      %p45 = scmp.ne.s32.totalorder %s30, %s44
      %p46 = scmp.eq.s32.totalorder %s25, 0
      %p47 = por %p45, %p46
      %s48 = ssub.s32 %s19, %s26
      %p49 = scmp.eq.s32.totalorder %s48, 0
      %s51 = sadd.s32 %s50, 1
      %s52 = scalar_select %p49, %s50, %s51
      %p55 = pneg %p49
      %p56 = scmp.eq.s32.totalorder %s19, 1
      %p57 = por %p55, %p56
      %p58 = scmp.ne.s32.totalorder %s50, %s53
      %p59 = scmp.eq.s32.totalorder %s19, 0
      %p60 = por %p58, %p59
      %p61 = scmp.ne.s32.totalorder %s50, %s53
      %p62 = scmp.eq.s32.totalorder %s24, 1
      %p63 = por %p61, %p62
      %p64 = scmp.ne.s32.totalorder %s53, %s54
      %p65 = scmp.eq.s32.totalorder %s24, 0
      %p66 = por %p64, %p65
      %p67 = scmp.ne.s32.totalorder %s53, %s54
      %p68 = scmp.eq.s32.totalorder %s25, 1
      %p69 = por %p67, %p68
      %p71 = scmp.ne.s32.totalorder %s54, %s70
      %p72 = scmp.eq.s32.totalorder %s25, 0
      %p73 = por %p71, %p72
      %s74 = ssub.s32 %s19, %s26
      %p75 = scmp.eq.s32.totalorder %s74, 0
      %s77 = sadd.s32 %s76, 1
      %s78 = scalar_select %p75, %s76, %s77
      %p81 = pneg %p75
      %p82 = scmp.eq.s32.totalorder %s19, 1
      %p83 = por %p81, %p82
      %p84 = scmp.ne.s32.totalorder %s76, %s79
      %p85 = scmp.eq.s32.totalorder %s19, 0
      %p86 = por %p84, %p85
      %p87 = scmp.ne.s32.totalorder %s76, %s79
      %p88 = scmp.eq.s32.totalorder %s24, 1
      %p89 = por %p87, %p88
      %p90 = scmp.ne.s32.totalorder %s79, %s80
      %p91 = scmp.eq.s32.totalorder %s24, 0
      %p92 = por %p90, %p91
      %p93 = scmp.ne.s32.totalorder %s79, %s80
      %p94 = scmp.eq.s32.totalorder %s25, 1
      %p95 = por %p93, %p94
      %p97 = scmp.ne.s32.totalorder %s80, %s96
      %p98 = scmp.eq.s32.totalorder %s25, 0
      %p99 = por %p97, %p98
      %s100 = ssub.s32 %s19, %s26
      %p101 = scmp.eq.s32.totalorder %s100, 0
      %s103 = sadd.s32 %s102, 1
      %s104 = scalar_select %p101, %s102, %s103
      %p107 = pneg %p101
      %p108 = scmp.eq.s32.totalorder %s19, 1
      %p109 = por %p107, %p108
      %p110 = scmp.ne.s32.totalorder %s102, %s105
      %p111 = scmp.eq.s32.totalorder %s19, 0
      %p112 = por %p110, %p111
      %p113 = scmp.ne.s32.totalorder %s102, %s105
      %p114 = scmp.eq.s32.totalorder %s24, 1
      %p115 = por %p113, %p114
      %p116 = scmp.ne.s32.totalorder %s105, %s106
      %p117 = scmp.eq.s32.totalorder %s24, 0
      %p118 = por %p116, %p117
      %p119 = scmp.ne.s32.totalorder %s105, %s106
      %p120 = scmp.eq.s32.totalorder %s25, 1
      %p121 = por %p119, %p120
      %p123 = scmp.ne.s32.totalorder %s106, %s122
      %p124 = scmp.eq.s32.totalorder %s25, 0
      %p125 = por %p123, %p124
      %s126 = ssub.s32 %s19, %s26
      %p127 = scmp.eq.s32.totalorder %s126, 0
      %s129 = sadd.s32 %s128, 1
      %s130 = scalar_select %p127, %s128, %s129
      %p133 = pneg %p127
      %p134 = scmp.eq.s32.totalorder %s19, 1
      %p135 = por %p133, %p134
      %p136 = scmp.ne.s32.totalorder %s128, %s131
      %p137 = scmp.eq.s32.totalorder %s19, 0
      %p138 = por %p136, %p137
      %p139 = scmp.ne.s32.totalorder %s128, %s131
      %p140 = scmp.eq.s32.totalorder %s24, 1
      %p141 = por %p139, %p140
      %p142 = scmp.ne.s32.totalorder %s131, %s132
      %p143 = scmp.eq.s32.totalorder %s24, 0
      %p144 = por %p142, %p143
      %p145 = scmp.ne.s32.totalorder %s131, %s132
      %p146 = scmp.eq.s32.totalorder %s25, 1
      %p147 = por %p145, %p146
      %p149 = scmp.ne.s32.totalorder %s132, %s148
      %p150 = scmp.eq.s32.totalorder %s25, 0
      %p151 = por %p149, %p150
      %s152 = ssub.s32 %s19, %s26
      %p153 = scmp.eq.s32.totalorder %s152, 0
      %s155 = sadd.s32 %s154, 1
      %s156 = scalar_select %p153, %s154, %s155
      %p159 = pneg %p153
      %p160 = scmp.eq.s32.totalorder %s19, 1
      %p161 = por %p159, %p160
      %p162 = scmp.ne.s32.totalorder %s154, %s157
      %p163 = scmp.eq.s32.totalorder %s19, 0
      %p164 = por %p162, %p163
      %p165 = scmp.ne.s32.totalorder %s154, %s157
      %p166 = scmp.eq.s32.totalorder %s24, 1
      %p167 = por %p165, %p166
      %p168 = scmp.ne.s32.totalorder %s157, %s158
      %p169 = scmp.eq.s32.totalorder %s24, 0
      %p170 = por %p168, %p169
      %p171 = scmp.ne.s32.totalorder %s157, %s158
      %p172 = scmp.eq.s32.totalorder %s25, 1
      %p173 = por %p171, %p172
      %p175 = scmp.ne.s32.totalorder %s158, %s174
      %p176 = scmp.eq.s32.totalorder %s25, 0
      %p177 = por %p175, %p176
      %s178 = ssub.s32 %s19, %s26
      %p179 = scmp.eq.s32.totalorder %s178, 0
      %s181 = sadd.s32 %s180, 1
      %s182 = scalar_select %p179, %s180, %s181
      %p185 = pneg %p179
      %p186 = scmp.eq.s32.totalorder %s19, 1
      %p187 = por %p185, %p186
      %p188 = scmp.ne.s32.totalorder %s180, %s183
      %p189 = scmp.eq.s32.totalorder %s19, 0
      %p190 = por %p188, %p189
      %p191 = scmp.ne.s32.totalorder %s180, %s183
      %p192 = scmp.eq.s32.totalorder %s24, 1
      %p193 = por %p191, %p192
      %p194 = scmp.ne.s32.totalorder %s183, %s184
      %p195 = scmp.eq.s32.totalorder %s24, 0
      %p196 = por %p194, %p195
      %p197 = scmp.ne.s32.totalorder %s183, %s184
      %p198 = scmp.eq.s32.totalorder %s25, 1
      %p199 = por %p197, %p198
      %p201 = scmp.ne.s32.totalorder %s184, %s200
      %p202 = scmp.eq.s32.totalorder %s25, 0
      %p203 = por %p201, %p202
      %s205 = sadd.s32 %s204, 1
      %p208 = scmp.eq.s32.totalorder %s19, 1
      %p209 = scmp.ne.s32.totalorder %s204, %s206
      %p210 = scmp.eq.s32.totalorder %s19, 0
      %p211 = por %p209, %p210
      %p212 = scmp.ne.s32.totalorder %s204, %s206
      %p213 = scmp.eq.s32.totalorder %s24, 1
      %p214 = por %p212, %p213
      %p215 = scmp.ne.s32.totalorder %s206, %s207
      %p216 = scmp.eq.s32.totalorder %s24, 0
      %p217 = por %p215, %p216
      %p218 = scmp.ne.s32.totalorder %s206, %s207
      %p219 = scmp.eq.s32.totalorder %s25, 1
      %p220 = por %p218, %p219
      %p222 = scmp.ne.s32.totalorder %s207, %s221
      %p223 = scmp.eq.s32.totalorder %s25, 0
      %p224 = por %p222, %p223
      %s225 = ssub.s32 %s19, %s26
      %p226 = scmp.eq.s32.totalorder %s225, 0
      %s228 = sadd.s32 %s227, 1
      %s229 = scalar_select %p226, %s227, %s228
      %p232 = pneg %p226
      %p233 = scmp.eq.s32.totalorder %s19, 1
      %p234 = por %p232, %p233
      %p235 = scmp.ne.s32.totalorder %s227, %s230
      %p236 = scmp.eq.s32.totalorder %s19, 0
      %p237 = por %p235, %p236
      %p238 = scmp.ne.s32.totalorder %s227, %s230
      %p239 = scmp.eq.s32.totalorder %s24, 1
      %p240 = por %p238, %p239
      %p241 = scmp.ne.s32.totalorder %s230, %s231
      %p242 = scmp.eq.s32.totalorder %s24, 0
      %p243 = por %p241, %p242
      %p244 = scmp.ne.s32.totalorder %s230, %s231
      %p245 = scmp.eq.s32.totalorder %s25, 1
      %p246 = por %p244, %p245
      %p248 = scmp.ne.s32.totalorder %s231, %s247
      %p249 = scmp.eq.s32.totalorder %s25, 0
      %p250 = por %p248, %p249
      %p251 = scmp.le.s32.totalorder 1, %s19
      %p252 = scmp.lt.s32.totalorder %s19, 3
      %p253 = pnand %p251, %p252
      %p254 = pneg %p253
      // Predicated region
      $region9: #{encoder_mod_forward.1} parent=5 // pred_check
        _
      $region10: #{encoder_mod_forward.1} parent=5 // pred_check_branch
        %256 = sbr.rel (%p253) target = $region12
      $region11: #{encoder_mod_forward.1} parent=5 // pred_region
        %s257 = ssub.s32 %s19, 1
        // Predicated region
        $region13: #{encoder_mod_forward.1} parent=11 // pred_check
          %p258 = pneg %p40
        $region14: #{encoder_mod_forward.1} parent=11 // pred_check_branch
          %260 = sbr.rel (%p258) target = $region16
        $region15: #{encoder_mod_forward.1} parent=11 // pred_region
          _
        $region16: #{encoder_mod_forward.1} parent=11 // pred_fallthru
          _
      $region12: #{encoder_mod_forward.1} parent=5 // pred_fallthru
        _
      %p261 = scmp.lt.s32.totalorder %s19, 2
      // Predicated region
      $region17: #{encoder_mod_forward.1} parent=5 // pred_check
        %p262 = pneg %p261
      $region18: #{encoder_mod_forward.1} parent=5 // pred_check_branch
        %264 = sbr.rel (%p262) target = $region20
      $region19: #{encoder_mod_forward.1} parent=5 // pred_region
        // Predicated region
        $region21: #{encoder_mod_forward.1} parent=19 // pred_check
          %p265 = pneg %p60
        $region22: #{encoder_mod_forward.1} parent=19 // pred_check_branch
          %267 = sbr.rel (%p265) target = $region24
        $region23: #{encoder_mod_forward.1} parent=19 // pred_region
          %p268 = scmp.lt.s32.totalorder %s19, 1
          %s269 = scalar_select %p268, %s19, 1
          %s270 = smul.addr %s269, 4
          %s271 = smul.addr %s270, 4
          %s272 = scalar_lea.vmem %s1, %s271
        $region24: #{encoder_mod_forward.1} parent=19 // pred_fallthru
          _
        // Predicated region
        $region25: #{encoder_mod_forward.1} parent=19 // pred_check
          %p273 = pneg %p86
        $region26: #{encoder_mod_forward.1} parent=19 // pred_check_branch
          %275 = sbr.rel (%p273) target = $region28
        $region27: #{encoder_mod_forward.1} parent=19 // pred_region
          %p276 = scmp.lt.s32.totalorder %s19, 1
          %s277 = scalar_select %p276, %s19, 1
          %s278 = smul.addr %s277, 4
          %s279 = smul.addr %s278, 4
          %s280 = scalar_lea.vmem %s2, %s279
        $region28: #{encoder_mod_forward.1} parent=19 // pred_fallthru
          _
        // Predicated region
        $region29: #{encoder_mod_forward.1} parent=19 // pred_check
          %p281 = pneg %p112
        $region30: #{encoder_mod_forward.1} parent=19 // pred_check_branch
          %283 = sbr.rel (%p281) target = $region32
        $region31: #{encoder_mod_forward.1} parent=19 // pred_region
          %p284 = scmp.lt.s32.totalorder %s19, 1
          %s285 = scalar_select %p284, %s19, 1
          %s286 = smul.addr %s285, 4
          %s287 = smul.addr %s286, 4
          %s288 = scalar_lea.vmem %s3, %s287
        $region32: #{encoder_mod_forward.1} parent=19 // pred_fallthru
          _
        // Predicated region
        $region33: #{encoder_mod_forward.1} parent=19 // pred_check
          %p289 = pneg %p138
        $region34: #{encoder_mod_forward.1} parent=19 // pred_check_branch
          %291 = sbr.rel (%p289) target = $region36
        $region35: #{encoder_mod_forward.1} parent=19 // pred_region
          %p292 = scmp.lt.s32.totalorder %s19, 1
          %s293 = scalar_select %p292, %s19, 1
          %s294 = smul.addr %s293, 16
          %s295 = smul.addr %s294, 4
          %s296 = scalar_lea.vmem %s4, %s295
        $region36: #{encoder_mod_forward.1} parent=19 // pred_fallthru
          _
        // Predicated region
        $region37: #{encoder_mod_forward.1} parent=19 // pred_check
          %p297 = pneg %p164
        $region38: #{encoder_mod_forward.1} parent=19 // pred_check_branch
          %299 = sbr.rel (%p297) target = $region40
        $region39: #{encoder_mod_forward.1} parent=19 // pred_region
          %p300 = scmp.lt.s32.totalorder %s19, 1
          %s301 = scalar_select %p300, %s19, 1
          %s302 = smul.addr %s301, 8
          %s303 = scalar_lea.vmem %s5, %s302
        $region40: #{encoder_mod_forward.1} parent=19 // pred_fallthru
          _
        // Predicated region
        $region41: #{encoder_mod_forward.1} parent=19 // pred_check
          %p304 = pneg %p190
        $region42: #{encoder_mod_forward.1} parent=19 // pred_check_branch
          %306 = sbr.rel (%p304) target = $region44
        $region43: #{encoder_mod_forward.1} parent=19 // pred_region
          %p307 = scmp.lt.s32.totalorder %s19, 1
          %s308 = scalar_select %p307, %s19, 1
          %s309 = scalar_lea.vmem %s6, %s308
        $region44: #{encoder_mod_forward.1} parent=19 // pred_fallthru
          _
      $region20: #{encoder_mod_forward.1} parent=5 // pred_fallthru
        _
      %p310 = scmp.le.s32.totalorder 1, %s19
      %p311 = scmp.lt.s32.totalorder %s19, 3
      %p312 = pnand %p310, %p311
      %p313 = pneg %p312
      // Predicated region
      $region45: #{encoder_mod_forward.1} parent=5 // pred_check
        _
      $region46: #{encoder_mod_forward.1} parent=5 // pred_check_branch
        %315 = sbr.rel (%p312) target = $region48
      $region47: #{encoder_mod_forward.1} parent=5 // pred_region
        %s316 = ssub.s32 %s19, 1
        %p317 = pneg %p40
        %p318 = pneg %p37
        %p319 = scmp.lt.s32.totalorder %s24, 1
        %s320 = scalar_select %p319, %s24, 1
        %s321 = smul.addr %s320, 4
        %s322 = smul.addr %s321, 4
        %s323 = scalar_lea.vmem %s1, %s322
        %p324 = pneg %p66
        %p325 = pneg %p63
        %p326 = scmp.lt.s32.totalorder %s24, 1
        %s327 = scalar_select %p326, %s24, 1
        %s328 = smul.addr %s327, 4
        %s329 = smul.addr %s328, 4
        %s330 = scalar_lea.vmem %s2, %s329
        %p331 = pneg %p92
        %p332 = pneg %p89
        %p333 = scmp.lt.s32.totalorder %s24, 1
        %s334 = scalar_select %p333, %s24, 1
        %s335 = smul.addr %s334, 4
        %s336 = smul.addr %s335, 4
        %s337 = scalar_lea.vmem %s3, %s336
        %p338 = pneg %p118
        %p339 = pneg %p115
        %p340 = scmp.lt.s32.totalorder %s24, 1
        %s341 = scalar_select %p340, %s24, 1
        %s342 = smul.addr %s341, 16
        %s343 = smul.addr %s342, 4
        %s344 = scalar_lea.vmem %s4, %s343
        %p345 = pneg %p144
        %p346 = pneg %p141
        %p347 = scmp.lt.s32.totalorder %s24, 1
        %s348 = scalar_select %p347, %s24, 1
        %s349 = smul.addr %s348, 8
        %s350 = scalar_lea.vmem %s5, %s349
        %p351 = pneg %p170
        %p352 = pneg %p167
        %p353 = scmp.lt.s32.totalorder %s24, 1
        %s354 = scalar_select %p353, %s24, 1
        %s355 = scalar_lea.vmem %s6, %s354
        %p356 = pneg %p196
        %p357 = pneg %p193
        %p358 = pneg %p217
        %p359 = pneg %p214
        %p360 = pneg %p243
        %p361 = pneg %p240
        %s362 = sand.u32 %s230, 1
        %s363 = scalar_lea.sflag [#allocation5], %s362
        %s364 = sand.u32 %s230, 1
        %s365 = smul.addr %s364, 32
        %s366 = scalar_lea.vmem [#allocation4], %s365
        %p367 = scmp.lt.s32.totalorder %s24, 1
        %s368 = scalar_select %p367, %s24, 1
        %s369 = smul.addr %s368, 4
        %s370 = smul.addr %s369, 4
        %s371 = scalar_lea.vmem %s1, %s370
        %p372 = scmp.lt.s32.totalorder %s24, 1
        %s373 = scalar_select %p372, %s24, 1
        %s374 = smul.addr %s373, 4
        %s375 = smul.addr %s374, 4
        %s376 = scalar_lea.vmem %s2, %s375
        %p377 = scmp.lt.s32.totalorder %s24, 1
        %s378 = scalar_select %p377, %s24, 1
        %s379 = smul.addr %s378, 4
        %s380 = smul.addr %s379, 4
        %s381 = scalar_lea.vmem %s3, %s380
        %p382 = scmp.lt.s32.totalorder %s24, 1
        %s383 = scalar_select %p382, %s24, 1
        %s384 = smul.addr %s383, 16
        %s385 = smul.addr %s384, 4
        %s386 = scalar_lea.vmem %s4, %s385
        %p387 = scmp.lt.s32.totalorder %s24, 1
        %s388 = scalar_select %p387, %s24, 1
        %s389 = smul.addr %s388, 8
        %s390 = scalar_lea.vmem %s5, %s389
        %p391 = scmp.lt.s32.totalorder %s24, 1
        %s392 = scalar_select %p391, %s24, 1
        %s393 = scalar_lea.vmem %s6, %s392
        %p395 = scmp.eq.s32.totalorder %s24, 0
        // Predicated region
        $region49: #{encoder_mod_forward.1} parent=47 // pred_check
          %p396 = pneg %p395
        $region50: #{encoder_mod_forward.1} parent=47 // pred_check_branch
          %398 = sbr.rel (%p396) target = $region52
        $region51: #{encoder_mod_forward.1} parent=47 // pred_region
          %v399 = vld [vmem:[%s0] sm:$0xff]
          %v400 = vld [vmem:[%s0 + $0x8] sm:$0xff]
          %vm401 = vcmask 261120
          %402 = vst.msk [vmem:[#allocation2] sm:$0xff] %vm401, %v399
          %403 = vst.msk [vmem:[#allocation2 + $0x8] sm:$0xff] %vm401, %v400
        $region52: #{encoder_mod_forward.1} parent=47 // pred_fallthru
          _
        %v404 = vld [vmem:[#allocation2] sm:$0xff]
        %v405 = vld [vmem:[#allocation2 + $0x8] sm:$0xff]
        %v406 = vld [vmem:[%s390] sm:$0x1]
        %v407 = vld [vmem:[%s390 + $0x1] sm:$0x1]
        %v408 = vld [vmem:[%s390 + $0x2] sm:$0x1]
        %v409 = vld [vmem:[%s390 + $0x3] sm:$0x1]
        %v410 = vld [vmem:[%s390 + $0x4] sm:$0x1]
        %v411 = vld [vmem:[%s390 + $0x5] sm:$0x1]
        %v412 = vld [vmem:[%s393] sm:$0x1]
        %vm413 = vcmask 261120
        %v414 = vsel %vm413, %v404, 0.0
        %415 = vadd.xlane.f32.xlu0 %v414
        %v416 = vpop.xlane.xlu0 %415
        %v417 = vsel %vm413, %v405, 0.0
        %418 = vadd.xlane.f32.xlu0 %v417
        %v419 = vpop.xlane.xlu0 %418
        %v420 = vrcp.pop 32.0
        %v421 = vmul.f32 %v416, %v420
        %v422 = vmul.f32 %v419, %v420
        %v423 = vsub.f32 %v404, %v421
        %v424 = vsub.f32 %v405, %v422
        %v425 = vmul.f32 %v423, %v423
        %v426 = vmul.f32 %v424, %v424
        %v427 = vsel %vm413, %v425, 0.0
        %428 = vadd.xlane.f32.xlu0 %v427
        %v429 = vpop.xlane.xlu0 %428
        %v430 = vsel %vm413, %v426, 0.0
        %431 = vadd.xlane.f32.xlu0 %v430
        %v432 = vpop.xlane.xlu0 %431
        %v433 = vmul.f32 %v429, %v420
        %v434 = vmul.f32 %v432, %v420
        %v435 = vadd.f32 %v433, 1e-05
        %v436 = vadd.f32 %v434, 1e-05
        %v437 = vrsqrt.pop %v435
        %v438 = vrsqrt.pop %v436
        %v439 = vmul.f32 %v423, %v437
        %v440 = vmul.f32 %v424, %v438
        %v441 = vlaneseq
        %v442 = vshrl.u32 %v441, 7
        %v443 = vsub.s32 0, %v442
        %v444 = vrot.slane %v406, %v443
        %v445 = vmul.f32 %v439, %v444
        %v446 = vmul.f32 %v440, %v444
        %v447 = vlaneseq
        %v448 = vshrl.u32 %v447, 7
        %v449 = vsub.s32 0, %v448
        %v450 = vrot.slane %v407, %v449
        %v451 = vadd.f32 %v445, %v450
        %v452 = vadd.f32 %v446, %v450
        %v453 = vpack.c.bf16 %v452, %v451
        %v454 = vld [vmem:[%s371] sm:$0xf]
        %v455 = vld [vmem:[%s371 + $0x4] sm:$0xf]
        %v456 = vld [vmem:[%s371 + $0x8] sm:$0xf]
        %v457 = vld [vmem:[%s371 + $0xc] sm:$0xf]
        %v462 = vunpack.c.l.b16 %v454
        %v463 = vunpack.c.l.b16 %v455
        %v464 = vunpack.c.l.b16 %v456
        %v465 = vunpack.c.l.b16 %v457
        %v466 = vpack.c.b16 %v463, %v462
        %v467 = vpack.c.b16 %v465, %v464
        %v471 = vsel %vm413, %v453, 0
        %473 = vmatprep.subr.bf16.mxu0 0
        %474 = vmatpush1.bf16.msra.mxu0 0
        %475 = vmatprep.subr.bf16.mxu0 0
        %476 = vmatpush1.bf16.msra.mxu0 0
        %477 = vmatprep.subr.bf16.mxu0 0
        %478 = vmatpush1.bf16.msra.mxu0 0
        %479 = vmatprep.subr.bf16.mxu0 0
        %480 = vmatpush1.bf16.msra.mxu0 0
        %481 = vmatprep.subr.bf16.mxu0 0
        %482 = vmatpush1.bf16.msra.mxu0 0
        %483 = vmatprep.subr.bf16.mxu0 0
        %484 = vmatpush1.bf16.msra.mxu0 0
        %485 = vmatprep.subr.bf16.mxu0 0
        %486 = vmatpush1.bf16.msra.mxu0 %v467
        %487 = vmatprep.subr.bf16.mxu0 0
        %488 = vmatpush1.bf16.msra.mxu0 %v466
        %489 = vmatprep.subr.bf16.mxu0 0
        %490 = vmatpush2.bf16.msra.mxu0 0
        %491 = vmatprep.subr.bf16.mxu0 0
        %492 = vmatpush2.bf16.msra.mxu0 0
        %493 = vmatprep.subr.bf16.mxu0 0
        %494 = vmatpush2.bf16.msra.mxu0 0
        %495 = vmatprep.subr.bf16.mxu0 0
        %496 = vmatpush2.bf16.msra.mxu0 0
        %497 = vmatprep.subr.bf16.mxu0 0
        %498 = vmatpush2.bf16.msra.mxu0 0
        %499 = vmatprep.subr.bf16.mxu0 0
        %500 = vmatpush2.bf16.msra.mxu0 0
        %501 = vmatprep.subr.bf16.mxu0 0
        %502 = vmatpush2.bf16.msra.mxu0 0
        %503 = vmatprep.subr.bf16.mxu0 0
        %504 = vmatpush2.bf16.msra.mxu0 0
        %505 = vmatprep.mubr.bf16.mxu0 0
        %506 = vmatmul.mubr.bf16.gmra.mxu0 %v471
        %v507 = vpop.f32.mrf.mxu0
        %v508 = vadd.f32 0.0, %v507
        %v509 = vpop.f32.mrf.mxu0
        %v510 = vpop.f32.mrf.mxu0
        %v511 = vadd.f32 0.0, %v510
        %v512 = vpop.f32.mrf.mxu0
        %513 = vdwg.mxu0
        %516 = vrot.lane.b32.xlu0 %v508, 120
        %v517 = vpop.permute.xlu0 %516
        %518 = vrot.lane.b32.xlu0 %v511, 120
        %v519 = vpop.permute.xlu0 %518
        %522 = vrot.lane.b32.xlu0 %v508, 112
        %v523 = vpop.permute.xlu0 %522
        %524 = vrot.lane.b32.xlu0 %v511, 112
        %v525 = vpop.permute.xlu0 %524
        %528 = vrot.lane.b32.xlu0 %v508, 104
        %v529 = vpop.permute.xlu0 %528
        %530 = vrot.lane.b32.xlu0 %v511, 104
        %v531 = vpop.permute.xlu0 %530
        %v534 = vpack.c.bf16 %v508, %v508
        %v535 = vpack.c.bf16 %v511, %v511
        %v536 = vpack.c.bf16 %v517, %v517
        %v537 = vpack.c.bf16 %v519, %v519
        %v538 = vpack.c.bf16 %v523, %v523
        %v539 = vpack.c.bf16 %v525, %v525
        %v540 = vpack.c.bf16 %v529, %v529
        %v541 = vpack.c.bf16 %v531, %v531
        %543 = vrot.lane.b32.xlu0 %v534, 96
        %v544 = vpop.permute.xlu0 %543
        %vm545 = vcmask 64512
        %v547 = vsel %vm545, %v534, 0
        %v550 = vsel %vm545, %v544, 0
        %552 = vmatprep.subr.bf16.mxu0 0
        %553 = vmatpush1.bf16.xpose.msra.mxu0 0
        %554 = vmatprep.subr.bf16.mxu0 0
        %555 = vmatpush1.bf16.xpose.msra.mxu0 0
        %556 = vmatprep.subr.bf16.mxu0 0
        %557 = vmatpush1.bf16.xpose.msra.mxu0 0
        %558 = vmatprep.subr.bf16.mxu0 0
        %559 = vmatpush1.bf16.xpose.msra.mxu0 0
        %560 = vmatprep.subr.bf16.mxu0 0
        %561 = vmatpush1.bf16.xpose.msra.mxu0 0
        %562 = vmatprep.subr.bf16.mxu0 0
        %563 = vmatpush1.bf16.xpose.msra.mxu0 0
        %564 = vmatprep.subr.bf16.mxu0 0
        %565 = vmatpush1.bf16.xpose.msra.mxu0 0
        %566 = vmatprep.subr.bf16.mxu0 0
        %567 = vmatpush1.bf16.xpose.msra.mxu0 %v550
        %568 = vmatprep.subr.bf16.mxu0 0
        %569 = vmatpush2.bf16.xpose.msra.mxu0 0
        %570 = vmatprep.subr.bf16.mxu0 0
        %571 = vmatpush2.bf16.xpose.msra.mxu0 0
        %572 = vmatprep.subr.bf16.mxu0 0
        %573 = vmatpush2.bf16.xpose.msra.mxu0 0
        %574 = vmatprep.subr.bf16.mxu0 0
        %575 = vmatpush2.bf16.xpose.msra.mxu0 0
        %576 = vmatprep.subr.bf16.mxu0 0
        %577 = vmatpush2.bf16.xpose.msra.mxu0 0
        %578 = vmatprep.subr.bf16.mxu0 0
        %579 = vmatpush2.bf16.xpose.msra.mxu0 0
        %580 = vmatprep.subr.bf16.mxu0 0
        %581 = vmatpush2.bf16.xpose.msra.mxu0 0
        %582 = vmatprep.subr.bf16.mxu0 0
        %583 = vmatpush2.bf16.xpose.msra.mxu0 0
        %584 = vmatprep.mubr.bf16.mxu0 0
        %585 = vmatmul.mubr.bf16.gmra.mxu0 %v547
        %v586 = vpop.f32.mrf.mxu0
        %v587 = vadd.f32 0.0, %v586
        %v588 = vpop.f32.mrf.mxu0
        %v589 = vpop.f32.mrf.mxu0
        %v590 = vpop.f32.mrf.mxu0
        %591 = vdwg.mxu0
        %593 = vrot.lane.b32.xlu0 %v535, 96
        %v594 = vpop.permute.xlu0 %593
        %v596 = vsel %vm545, %v535, 0
        %v599 = vsel %vm545, %v594, 0
        %601 = vmatprep.subr.bf16.mxu0 0
        %602 = vmatpush1.bf16.xpose.msra.mxu0 0
        %603 = vmatprep.subr.bf16.mxu0 0
        %604 = vmatpush1.bf16.xpose.msra.mxu0 0
        %605 = vmatprep.subr.bf16.mxu0 0
        %606 = vmatpush1.bf16.xpose.msra.mxu0 0
        %607 = vmatprep.subr.bf16.mxu0 0
        %608 = vmatpush1.bf16.xpose.msra.mxu0 0
        %609 = vmatprep.subr.bf16.mxu0 0
        %610 = vmatpush1.bf16.xpose.msra.mxu0 0
        %611 = vmatprep.subr.bf16.mxu0 0
        %612 = vmatpush1.bf16.xpose.msra.mxu0 0
        %613 = vmatprep.subr.bf16.mxu0 0
        %614 = vmatpush1.bf16.xpose.msra.mxu0 0
        %615 = vmatprep.subr.bf16.mxu0 0
        %616 = vmatpush1.bf16.xpose.msra.mxu0 %v599
        %617 = vmatprep.subr.bf16.mxu0 0
        %618 = vmatpush2.bf16.xpose.msra.mxu0 0
        %619 = vmatprep.subr.bf16.mxu0 0
        %620 = vmatpush2.bf16.xpose.msra.mxu0 0
        %621 = vmatprep.subr.bf16.mxu0 0
        %622 = vmatpush2.bf16.xpose.msra.mxu0 0
        %623 = vmatprep.subr.bf16.mxu0 0
        %624 = vmatpush2.bf16.xpose.msra.mxu0 0
        %625 = vmatprep.subr.bf16.mxu0 0
        %626 = vmatpush2.bf16.xpose.msra.mxu0 0
        %627 = vmatprep.subr.bf16.mxu0 0
        %628 = vmatpush2.bf16.xpose.msra.mxu0 0
        %629 = vmatprep.subr.bf16.mxu0 0
        %630 = vmatpush2.bf16.xpose.msra.mxu0 0
        %631 = vmatprep.subr.bf16.mxu0 0
        %632 = vmatpush2.bf16.xpose.msra.mxu0 0
        %633 = vmatprep.mubr.bf16.mxu0 0
        %634 = vmatmul.mubr.bf16.gmra.mxu0 %v596
        %v635 = vpop.f32.mrf.mxu0
        %v636 = vadd.f32 0.0, %v635
        %v637 = vpop.f32.mrf.mxu0
        %v638 = vpop.f32.mrf.mxu0
        %v639 = vpop.f32.mrf.mxu0
        %640 = vdwg.mxu0
        %642 = vrot.lane.b32.xlu0 %v536, 96
        %v643 = vpop.permute.xlu0 %642
        %v645 = vsel %vm545, %v536, 0
        %v648 = vsel %vm545, %v643, 0
        %650 = vmatprep.subr.bf16.mxu0 0
        %651 = vmatpush1.bf16.xpose.msra.mxu0 0
        %652 = vmatprep.subr.bf16.mxu0 0
        %653 = vmatpush1.bf16.xpose.msra.mxu0 0
        %654 = vmatprep.subr.bf16.mxu0 0
        %655 = vmatpush1.bf16.xpose.msra.mxu0 0
        %656 = vmatprep.subr.bf16.mxu0 0
        %657 = vmatpush1.bf16.xpose.msra.mxu0 0
        %658 = vmatprep.subr.bf16.mxu0 0
        %659 = vmatpush1.bf16.xpose.msra.mxu0 0
        %660 = vmatprep.subr.bf16.mxu0 0
        %661 = vmatpush1.bf16.xpose.msra.mxu0 0
        %662 = vmatprep.subr.bf16.mxu0 0
        %663 = vmatpush1.bf16.xpose.msra.mxu0 0
        %664 = vmatprep.subr.bf16.mxu0 0
        %665 = vmatpush1.bf16.xpose.msra.mxu0 %v648
        %666 = vmatprep.subr.bf16.mxu0 0
        %667 = vmatpush2.bf16.xpose.msra.mxu0 0
        %668 = vmatprep.subr.bf16.mxu0 0
        %669 = vmatpush2.bf16.xpose.msra.mxu0 0
        %670 = vmatprep.subr.bf16.mxu0 0
        %671 = vmatpush2.bf16.xpose.msra.mxu0 0
        %672 = vmatprep.subr.bf16.mxu0 0
        %673 = vmatpush2.bf16.xpose.msra.mxu0 0
        %674 = vmatprep.subr.bf16.mxu0 0
        %675 = vmatpush2.bf16.xpose.msra.mxu0 0
        %676 = vmatprep.subr.bf16.mxu0 0
        %677 = vmatpush2.bf16.xpose.msra.mxu0 0
        %678 = vmatprep.subr.bf16.mxu0 0
        %679 = vmatpush2.bf16.xpose.msra.mxu0 0
        %680 = vmatprep.subr.bf16.mxu0 0
        %681 = vmatpush2.bf16.xpose.msra.mxu0 0
        %682 = vmatprep.mubr.bf16.mxu0 0
        %683 = vmatmul.mubr.bf16.gmra.mxu0 %v645
        %v684 = vpop.f32.mrf.mxu0
        %v685 = vadd.f32 0.0, %v684
        %v686 = vpop.f32.mrf.mxu0
        %v687 = vpop.f32.mrf.mxu0
        %v688 = vpop.f32.mrf.mxu0
        %689 = vdwg.mxu0
        %691 = vrot.lane.b32.xlu0 %v537, 96
        %v692 = vpop.permute.xlu0 %691
        %v694 = vsel %vm545, %v537, 0
        %v697 = vsel %vm545, %v692, 0
        %699 = vmatprep.subr.bf16.mxu0 0
        %700 = vmatpush1.bf16.xpose.msra.mxu0 0
        %701 = vmatprep.subr.bf16.mxu0 0
        %702 = vmatpush1.bf16.xpose.msra.mxu0 0
        %703 = vmatprep.subr.bf16.mxu0 0
        %704 = vmatpush1.bf16.xpose.msra.mxu0 0
        %705 = vmatprep.subr.bf16.mxu0 0
        %706 = vmatpush1.bf16.xpose.msra.mxu0 0
        %707 = vmatprep.subr.bf16.mxu0 0
        %708 = vmatpush1.bf16.xpose.msra.mxu0 0
        %709 = vmatprep.subr.bf16.mxu0 0
        %710 = vmatpush1.bf16.xpose.msra.mxu0 0
        %711 = vmatprep.subr.bf16.mxu0 0
        %712 = vmatpush1.bf16.xpose.msra.mxu0 0
        %713 = vmatprep.subr.bf16.mxu0 0
        %714 = vmatpush1.bf16.xpose.msra.mxu0 %v697
        %715 = vmatprep.subr.bf16.mxu0 0
        %716 = vmatpush2.bf16.xpose.msra.mxu0 0
        %717 = vmatprep.subr.bf16.mxu0 0
        %718 = vmatpush2.bf16.xpose.msra.mxu0 0
        %719 = vmatprep.subr.bf16.mxu0 0
        %720 = vmatpush2.bf16.xpose.msra.mxu0 0
        %721 = vmatprep.subr.bf16.mxu0 0
        %722 = vmatpush2.bf16.xpose.msra.mxu0 0
        %723 = vmatprep.subr.bf16.mxu0 0
        %724 = vmatpush2.bf16.xpose.msra.mxu0 0
        %725 = vmatprep.subr.bf16.mxu0 0
        %726 = vmatpush2.bf16.xpose.msra.mxu0 0
        %727 = vmatprep.subr.bf16.mxu0 0
        %728 = vmatpush2.bf16.xpose.msra.mxu0 0
        %729 = vmatprep.subr.bf16.mxu0 0
        %730 = vmatpush2.bf16.xpose.msra.mxu0 0
        %731 = vmatprep.mubr.bf16.mxu0 0
        %732 = vmatmul.mubr.bf16.gmra.mxu0 %v694
        %v733 = vpop.f32.mrf.mxu0
        %v734 = vadd.f32 0.0, %v733
        %v735 = vpop.f32.mrf.mxu0
        %v736 = vpop.f32.mrf.mxu0
        %v737 = vpop.f32.mrf.mxu0
        %738 = vdwg.mxu0
        %740 = vrot.lane.b32.xlu0 %v538, 96
        %v741 = vpop.permute.xlu0 %740
        %v743 = vsel %vm545, %v538, 0
        %v746 = vsel %vm545, %v741, 0
        %748 = vmatprep.subr.bf16.mxu0 0
        %749 = vmatpush1.bf16.xpose.msra.mxu0 0
        %750 = vmatprep.subr.bf16.mxu0 0
        %751 = vmatpush1.bf16.xpose.msra.mxu0 0
        %752 = vmatprep.subr.bf16.mxu0 0
        %753 = vmatpush1.bf16.xpose.msra.mxu0 0
        %754 = vmatprep.subr.bf16.mxu0 0
        %755 = vmatpush1.bf16.xpose.msra.mxu0 0
        %756 = vmatprep.subr.bf16.mxu0 0
        %757 = vmatpush1.bf16.xpose.msra.mxu0 0
        %758 = vmatprep.subr.bf16.mxu0 0
        %759 = vmatpush1.bf16.xpose.msra.mxu0 0
        %760 = vmatprep.subr.bf16.mxu0 0
        %761 = vmatpush1.bf16.xpose.msra.mxu0 0
        %762 = vmatprep.subr.bf16.mxu0 0
        %763 = vmatpush1.bf16.xpose.msra.mxu0 %v746
        %764 = vmatprep.subr.bf16.mxu0 0
        %765 = vmatpush2.bf16.xpose.msra.mxu0 0
        %766 = vmatprep.subr.bf16.mxu0 0
        %767 = vmatpush2.bf16.xpose.msra.mxu0 0
        %768 = vmatprep.subr.bf16.mxu0 0
        %769 = vmatpush2.bf16.xpose.msra.mxu0 0
        %770 = vmatprep.subr.bf16.mxu0 0
        %771 = vmatpush2.bf16.xpose.msra.mxu0 0
        %772 = vmatprep.subr.bf16.mxu0 0
        %773 = vmatpush2.bf16.xpose.msra.mxu0 0
        %774 = vmatprep.subr.bf16.mxu0 0
        %775 = vmatpush2.bf16.xpose.msra.mxu0 0
        %776 = vmatprep.subr.bf16.mxu0 0
        %777 = vmatpush2.bf16.xpose.msra.mxu0 0
        %778 = vmatprep.subr.bf16.mxu0 0
        %779 = vmatpush2.bf16.xpose.msra.mxu0 0
        %780 = vmatprep.mubr.bf16.mxu0 0
        %781 = vmatmul.mubr.bf16.gmra.mxu0 %v743
        %v782 = vpop.f32.mrf.mxu0
        %v783 = vadd.f32 0.0, %v782
        %v784 = vpop.f32.mrf.mxu0
        %v785 = vpop.f32.mrf.mxu0
        %v786 = vpop.f32.mrf.mxu0
        %787 = vdwg.mxu0
        %789 = vrot.lane.b32.xlu0 %v539, 96
        %v790 = vpop.permute.xlu0 %789
        %v792 = vsel %vm545, %v539, 0
        %v795 = vsel %vm545, %v790, 0
        %797 = vmatprep.subr.bf16.mxu0 0
        %798 = vmatpush1.bf16.xpose.msra.mxu0 0
        %799 = vmatprep.subr.bf16.mxu0 0
        %800 = vmatpush1.bf16.xpose.msra.mxu0 0
        %801 = vmatprep.subr.bf16.mxu0 0
        %802 = vmatpush1.bf16.xpose.msra.mxu0 0
        %803 = vmatprep.subr.bf16.mxu0 0
        %804 = vmatpush1.bf16.xpose.msra.mxu0 0
        %805 = vmatprep.subr.bf16.mxu0 0
        %806 = vmatpush1.bf16.xpose.msra.mxu0 0
        %807 = vmatprep.subr.bf16.mxu0 0
        %808 = vmatpush1.bf16.xpose.msra.mxu0 0
        %809 = vmatprep.subr.bf16.mxu0 0
        %810 = vmatpush1.bf16.xpose.msra.mxu0 0
        %811 = vmatprep.subr.bf16.mxu0 0
        %812 = vmatpush1.bf16.xpose.msra.mxu0 %v795
        %813 = vmatprep.subr.bf16.mxu0 0
        %814 = vmatpush2.bf16.xpose.msra.mxu0 0
        %815 = vmatprep.subr.bf16.mxu0 0
        %816 = vmatpush2.bf16.xpose.msra.mxu0 0
        %817 = vmatprep.subr.bf16.mxu0 0
        %818 = vmatpush2.bf16.xpose.msra.mxu0 0
        %819 = vmatprep.subr.bf16.mxu0 0
        %820 = vmatpush2.bf16.xpose.msra.mxu0 0
        %821 = vmatprep.subr.bf16.mxu0 0
        %822 = vmatpush2.bf16.xpose.msra.mxu0 0
        %823 = vmatprep.subr.bf16.mxu0 0
        %824 = vmatpush2.bf16.xpose.msra.mxu0 0
        %825 = vmatprep.subr.bf16.mxu0 0
        %826 = vmatpush2.bf16.xpose.msra.mxu0 0
        %827 = vmatprep.subr.bf16.mxu0 0
        %828 = vmatpush2.bf16.xpose.msra.mxu0 0
        %829 = vmatprep.mubr.bf16.mxu0 0
        %830 = vmatmul.mubr.bf16.gmra.mxu0 %v792
        %v831 = vpop.f32.mrf.mxu0
        %v832 = vadd.f32 0.0, %v831
        %v833 = vpop.f32.mrf.mxu0
        %v834 = vpop.f32.mrf.mxu0
        %v835 = vpop.f32.mrf.mxu0
        %836 = vdwg.mxu0
        %838 = vrot.lane.b32.xlu0 %v540, 96
        %v839 = vpop.permute.xlu0 %838
        %v841 = vsel %vm545, %v540, 0
        %v844 = vsel %vm545, %v839, 0
        %846 = vmatprep.subr.bf16.mxu0 0
        %847 = vmatpush1.bf16.xpose.msra.mxu0 0
        %848 = vmatprep.subr.bf16.mxu0 0
        %849 = vmatpush1.bf16.xpose.msra.mxu0 0
        %850 = vmatprep.subr.bf16.mxu0 0
        %851 = vmatpush1.bf16.xpose.msra.mxu0 0
        %852 = vmatprep.subr.bf16.mxu0 0
        %853 = vmatpush1.bf16.xpose.msra.mxu0 0
        %854 = vmatprep.subr.bf16.mxu0 0
        %855 = vmatpush1.bf16.xpose.msra.mxu0 0
        %856 = vmatprep.subr.bf16.mxu0 0
        %857 = vmatpush1.bf16.xpose.msra.mxu0 0
        %858 = vmatprep.subr.bf16.mxu0 0
        %859 = vmatpush1.bf16.xpose.msra.mxu0 0
        %860 = vmatprep.subr.bf16.mxu0 0
        %861 = vmatpush1.bf16.xpose.msra.mxu0 %v844
        %862 = vmatprep.subr.bf16.mxu0 0
        %863 = vmatpush2.bf16.xpose.msra.mxu0 0
        %864 = vmatprep.subr.bf16.mxu0 0
        %865 = vmatpush2.bf16.xpose.msra.mxu0 0
        %866 = vmatprep.subr.bf16.mxu0 0
        %867 = vmatpush2.bf16.xpose.msra.mxu0 0
        %868 = vmatprep.subr.bf16.mxu0 0
        %869 = vmatpush2.bf16.xpose.msra.mxu0 0
        %870 = vmatprep.subr.bf16.mxu0 0
        %871 = vmatpush2.bf16.xpose.msra.mxu0 0
        %872 = vmatprep.subr.bf16.mxu0 0
        %873 = vmatpush2.bf16.xpose.msra.mxu0 0
        %874 = vmatprep.subr.bf16.mxu0 0
        %875 = vmatpush2.bf16.xpose.msra.mxu0 0
        %876 = vmatprep.subr.bf16.mxu0 0
        %877 = vmatpush2.bf16.xpose.msra.mxu0 0
        %878 = vmatprep.mubr.bf16.mxu0 0
        %879 = vmatmul.mubr.bf16.gmra.mxu0 %v841
        %v880 = vpop.f32.mrf.mxu0
        %v881 = vadd.f32 0.0, %v880
        %v882 = vpop.f32.mrf.mxu0
        %v883 = vpop.f32.mrf.mxu0
        %v884 = vpop.f32.mrf.mxu0
        %885 = vdwg.mxu0
        %887 = vrot.lane.b32.xlu0 %v541, 96
        %v888 = vpop.permute.xlu0 %887
        %v890 = vsel %vm545, %v541, 0
        %v893 = vsel %vm545, %v888, 0
        %895 = vmatprep.subr.bf16.mxu0 0
        %896 = vmatpush1.bf16.xpose.msra.mxu0 0
        %897 = vmatprep.subr.bf16.mxu0 0
        %898 = vmatpush1.bf16.xpose.msra.mxu0 0
        %899 = vmatprep.subr.bf16.mxu0 0
        %900 = vmatpush1.bf16.xpose.msra.mxu0 0
        %901 = vmatprep.subr.bf16.mxu0 0
        %902 = vmatpush1.bf16.xpose.msra.mxu0 0
        %903 = vmatprep.subr.bf16.mxu0 0
        %904 = vmatpush1.bf16.xpose.msra.mxu0 0
        %905 = vmatprep.subr.bf16.mxu0 0
        %906 = vmatpush1.bf16.xpose.msra.mxu0 0
        %907 = vmatprep.subr.bf16.mxu0 0
        %908 = vmatpush1.bf16.xpose.msra.mxu0 0
        %909 = vmatprep.subr.bf16.mxu0 0
        %910 = vmatpush1.bf16.xpose.msra.mxu0 %v893
        %911 = vmatprep.subr.bf16.mxu0 0
        %912 = vmatpush2.bf16.xpose.msra.mxu0 0
        %913 = vmatprep.subr.bf16.mxu0 0
        %914 = vmatpush2.bf16.xpose.msra.mxu0 0
        %915 = vmatprep.subr.bf16.mxu0 0
        %916 = vmatpush2.bf16.xpose.msra.mxu0 0
        %917 = vmatprep.subr.bf16.mxu0 0
        %918 = vmatpush2.bf16.xpose.msra.mxu0 0
        %919 = vmatprep.subr.bf16.mxu0 0
        %920 = vmatpush2.bf16.xpose.msra.mxu0 0
        %921 = vmatprep.subr.bf16.mxu0 0
        %922 = vmatpush2.bf16.xpose.msra.mxu0 0
        %923 = vmatprep.subr.bf16.mxu0 0
        %924 = vmatpush2.bf16.xpose.msra.mxu0 0
        %925 = vmatprep.subr.bf16.mxu0 0
        %926 = vmatpush2.bf16.xpose.msra.mxu0 0
        %927 = vmatprep.mubr.bf16.mxu0 0
        %928 = vmatmul.mubr.bf16.gmra.mxu0 %v890
        %v929 = vpop.f32.mrf.mxu0
        %v930 = vadd.f32 0.0, %v929
        %v931 = vpop.f32.mrf.mxu0
        %v932 = vpop.f32.mrf.mxu0
        %v933 = vpop.f32.mrf.mxu0
        %934 = vdwg.mxu0
        %v935 = vsel %vm545, %v587, -inf
        %936 = vmax.xlane.f32.xlu0 %v935
        %v937 = vpop.xlane.xlu0 %936
        %v938 = vsel %vm545, %v636, -inf
        %939 = vmax.xlane.f32.xlu0 %v938
        %v940 = vpop.xlane.xlu0 %939
        %v941 = vsel %vm545, %v685, -inf
        %942 = vmax.xlane.f32.xlu0 %v941
        %v943 = vpop.xlane.xlu0 %942
        %v944 = vsel %vm545, %v734, -inf
        %945 = vmax.xlane.f32.xlu0 %v944
        %v946 = vpop.xlane.xlu0 %945
        %v947 = vsel %vm545, %v783, -inf
        %948 = vmax.xlane.f32.xlu0 %v947
        %v949 = vpop.xlane.xlu0 %948
        %v950 = vsel %vm545, %v832, -inf
        %951 = vmax.xlane.f32.xlu0 %v950
        %v952 = vpop.xlane.xlu0 %951
        %v953 = vsel %vm545, %v881, -inf
        %954 = vmax.xlane.f32.xlu0 %v953
        %v955 = vpop.xlane.xlu0 %954
        %v956 = vsel %vm545, %v930, -inf
        %957 = vmax.xlane.f32.xlu0 %v956
        %v958 = vpop.xlane.xlu0 %957
        %v959 = vsub.f32 %v587, %v937
        %v960 = vsub.f32 %v636, %v940
        %v961 = vsub.f32 %v685, %v943
        %v962 = vsub.f32 %v734, %v946
        %v963 = vsub.f32 %v783, %v949
        %v964 = vsub.f32 %v832, %v952
        %v965 = vsub.f32 %v881, %v955
        %v966 = vsub.f32 %v930, %v958
        %v967 = vmul.f32 %v959, 1.442695
        %v968 = vpow.pop %v967
        %v969 = vmul.f32 %v960, 1.442695
        %v970 = vpow.pop %v969
        %v971 = vmul.f32 %v961, 1.442695
        %v972 = vpow.pop %v971
        %v973 = vmul.f32 %v962, 1.442695
        %v974 = vpow.pop %v973
        %v975 = vmul.f32 %v963, 1.442695
        %v976 = vpow.pop %v975
        %v977 = vmul.f32 %v964, 1.442695
        %v978 = vpow.pop %v977
        %v979 = vmul.f32 %v965, 1.442695
        %v980 = vpow.pop %v979
        %v981 = vmul.f32 %v966, 1.442695
        %v982 = vpow.pop %v981
        %v983 = vsel %vm545, %v968, 0.0
        %984 = vadd.xlane.f32.xlu0 %v983
        %v985 = vpop.xlane.xlu0 %984
        %v986 = vsel %vm545, %v970, 0.0
        %987 = vadd.xlane.f32.xlu0 %v986
        %v988 = vpop.xlane.xlu0 %987
        %v989 = vsel %vm545, %v972, 0.0
        %990 = vadd.xlane.f32.xlu0 %v989
        %v991 = vpop.xlane.xlu0 %990
        %v992 = vsel %vm545, %v974, 0.0
        %993 = vadd.xlane.f32.xlu0 %v992
        %v994 = vpop.xlane.xlu0 %993
        %v995 = vsel %vm545, %v976, 0.0
        %996 = vadd.xlane.f32.xlu0 %v995
        %v997 = vpop.xlane.xlu0 %996
        %v998 = vsel %vm545, %v978, 0.0
        %999 = vadd.xlane.f32.xlu0 %v998
        %v1000 = vpop.xlane.xlu0 %999
        %v1001 = vsel %vm545, %v980, 0.0
        %1002 = vadd.xlane.f32.xlu0 %v1001
        %v1003 = vpop.xlane.xlu0 %1002
        %v1004 = vsel %vm545, %v982, 0.0
        %1005 = vadd.xlane.f32.xlu0 %v1004
        %v1006 = vpop.xlane.xlu0 %1005
        %v1007 = vrcp.pop %v985
        %v1008 = vmul.f32 %v968, %v1007
        %v1009 = vrcp.pop %v988
        %v1010 = vmul.f32 %v970, %v1009
        %v1011 = vrcp.pop %v991
        %v1012 = vmul.f32 %v972, %v1011
        %v1013 = vrcp.pop %v994
        %v1014 = vmul.f32 %v974, %v1013
        %v1015 = vrcp.pop %v997
        %v1016 = vmul.f32 %v976, %v1015
        %v1017 = vrcp.pop %v1000
        %v1018 = vmul.f32 %v978, %v1017
        %v1019 = vrcp.pop %v1003
        %v1020 = vmul.f32 %v980, %v1019
        %v1021 = vrcp.pop %v1006
        %v1022 = vmul.f32 %v982, %v1021
        %v1023 = vpack.c.bf16 %v1008, %v1008
        %v1024 = vpack.c.bf16 %v1010, %v1010
        %v1025 = vpack.c.bf16 %v1012, %v1012
        %v1026 = vpack.c.bf16 %v1014, %v1014
        %v1027 = vpack.c.bf16 %v1016, %v1016
        %v1028 = vpack.c.bf16 %v1018, %v1018
        %v1029 = vpack.c.bf16 %v1020, %v1020
        %v1030 = vpack.c.bf16 %v1022, %v1022
        %vm1031 = vcmask 60416
        %1032 = vst.msk [vmem:[%s366] sm:$0xf] %vm1031, %v1023
        %1033 = vst.msk [vmem:[%s366 + $0x4] sm:$0xf] %vm1031, %v1024
        %1034 = vst.msk [vmem:[%s366 + $0x8] sm:$0xf] %vm1031, %v1025
        %1035 = vst.msk [vmem:[%s366 + $0xc] sm:$0xf] %vm1031, %v1026
        %1036 = vst.msk [vmem:[%s366 + $0x10] sm:$0xf] %vm1031, %v1027
        %1037 = vst.msk [vmem:[%s366 + $0x14] sm:$0xf] %vm1031, %v1028
        %1038 = vst.msk [vmem:[%s366 + $0x18] sm:$0xf] %vm1031, %v1029
        %1039 = vst.msk [vmem:[%s366 + $0x1c] sm:$0xf] %vm1031, %v1030
        %1040 = vrot.lane.b32.xlu0 %v534, 64
        %v1041 = vpop.permute.xlu0 %1040
        %v1043 = vsel %vm545, %v1023, 0
        %vm1045 = vcmask 1043456
        %v1047 = vsel %vm1045, %v1041, 0
        %1049 = vmatprep.subr.bf16.mxu0 0
        %1050 = vmatpush1.bf16.msra.mxu0 0
        %1051 = vmatprep.subr.bf16.mxu0 0
        %1052 = vmatpush1.bf16.msra.mxu0 0
        %1053 = vmatprep.subr.bf16.mxu0 0
        %1054 = vmatpush1.bf16.msra.mxu0 0
        %1055 = vmatprep.subr.bf16.mxu0 0
        %1056 = vmatpush1.bf16.msra.mxu0 0
        %1057 = vmatprep.subr.bf16.mxu0 0
        %1058 = vmatpush1.bf16.msra.mxu0 0
        %1059 = vmatprep.subr.bf16.mxu0 0
        %1060 = vmatpush1.bf16.msra.mxu0 0
        %1061 = vmatprep.subr.bf16.mxu0 0
        %1062 = vmatpush1.bf16.msra.mxu0 0
        %1063 = vmatprep.subr.bf16.mxu0 0
        %1064 = vmatpush1.bf16.msra.mxu0 %v1047
        %1065 = vmatprep.subr.bf16.mxu0 0
        %1066 = vmatpush2.bf16.msra.mxu0 0
        %1067 = vmatprep.subr.bf16.mxu0 0
        %1068 = vmatpush2.bf16.msra.mxu0 0
        %1069 = vmatprep.subr.bf16.mxu0 0
        %1070 = vmatpush2.bf16.msra.mxu0 0
        %1071 = vmatprep.subr.bf16.mxu0 0
        %1072 = vmatpush2.bf16.msra.mxu0 0
        %1073 = vmatprep.subr.bf16.mxu0 0
        %1074 = vmatpush2.bf16.msra.mxu0 0
        %1075 = vmatprep.subr.bf16.mxu0 0
        %1076 = vmatpush2.bf16.msra.mxu0 0
        %1077 = vmatprep.subr.bf16.mxu0 0
        %1078 = vmatpush2.bf16.msra.mxu0 0
        %1079 = vmatprep.subr.bf16.mxu0 0
        %1080 = vmatpush2.bf16.msra.mxu0 0
        %1081 = vmatprep.mubr.bf16.mxu0 0
        %1082 = vmatmul.mubr.bf16.gmra.mxu0 %v1043
        %v1083 = vpop.f32.mrf.mxu0
        %v1084 = vadd.f32 0.0, %v1083
        %v1085 = vpop.f32.mrf.mxu0
        %v1086 = vpop.f32.mrf.mxu0
        %v1087 = vpop.f32.mrf.mxu0
        %1088 = vdwg.mxu0
        %1089 = vrot.lane.b32.xlu0 %v535, 64
        %v1090 = vpop.permute.xlu0 %1089
        %v1092 = vsel %vm545, %v1024, 0
        %v1095 = vsel %vm1045, %v1090, 0
        %1097 = vmatprep.subr.bf16.mxu0 0
        %1098 = vmatpush1.bf16.msra.mxu0 0
        %1099 = vmatprep.subr.bf16.mxu0 0
        %1100 = vmatpush1.bf16.msra.mxu0 0
        %1101 = vmatprep.subr.bf16.mxu0 0
        %1102 = vmatpush1.bf16.msra.mxu0 0
        %1103 = vmatprep.subr.bf16.mxu0 0
        %1104 = vmatpush1.bf16.msra.mxu0 0
        %1105 = vmatprep.subr.bf16.mxu0 0
        %1106 = vmatpush1.bf16.msra.mxu0 0
        %1107 = vmatprep.subr.bf16.mxu0 0
        %1108 = vmatpush1.bf16.msra.mxu0 0
        %1109 = vmatprep.subr.bf16.mxu0 0
        %1110 = vmatpush1.bf16.msra.mxu0 0
        %1111 = vmatprep.subr.bf16.mxu0 0
        %1112 = vmatpush1.bf16.msra.mxu0 %v1095
        %1113 = vmatprep.subr.bf16.mxu0 0
        %1114 = vmatpush2.bf16.msra.mxu0 0
        %1115 = vmatprep.subr.bf16.mxu0 0
        %1116 = vmatpush2.bf16.msra.mxu0 0
        %1117 = vmatprep.subr.bf16.mxu0 0
        %1118 = vmatpush2.bf16.msra.mxu0 0
        %1119 = vmatprep.subr.bf16.mxu0 0
        %1120 = vmatpush2.bf16.msra.mxu0 0
        %1121 = vmatprep.subr.bf16.mxu0 0
        %1122 = vmatpush2.bf16.msra.mxu0 0
        %1123 = vmatprep.subr.bf16.mxu0 0
        %1124 = vmatpush2.bf16.msra.mxu0 0
        %1125 = vmatprep.subr.bf16.mxu0 0
        %1126 = vmatpush2.bf16.msra.mxu0 0
        %1127 = vmatprep.subr.bf16.mxu0 0
        %1128 = vmatpush2.bf16.msra.mxu0 0
        %1129 = vmatprep.mubr.bf16.mxu0 0
        %1130 = vmatmul.mubr.bf16.gmra.mxu0 %v1092
        %v1131 = vpop.f32.mrf.mxu0
        %v1132 = vadd.f32 0.0, %v1131
        %v1133 = vpop.f32.mrf.mxu0
        %v1134 = vpop.f32.mrf.mxu0
        %v1135 = vpop.f32.mrf.mxu0
        %1136 = vdwg.mxu0
        %1137 = vrot.lane.b32.xlu0 %v536, 64
        %v1138 = vpop.permute.xlu0 %1137
        %v1140 = vsel %vm545, %v1025, 0
        %v1143 = vsel %vm1045, %v1138, 0
        %1145 = vmatprep.subr.bf16.mxu0 0
        %1146 = vmatpush1.bf16.msra.mxu0 0
        %1147 = vmatprep.subr.bf16.mxu0 0
        %1148 = vmatpush1.bf16.msra.mxu0 0
        %1149 = vmatprep.subr.bf16.mxu0 0
        %1150 = vmatpush1.bf16.msra.mxu0 0
        %1151 = vmatprep.subr.bf16.mxu0 0
        %1152 = vmatpush1.bf16.msra.mxu0 0
        %1153 = vmatprep.subr.bf16.mxu0 0
        %1154 = vmatpush1.bf16.msra.mxu0 0
        %1155 = vmatprep.subr.bf16.mxu0 0
        %1156 = vmatpush1.bf16.msra.mxu0 0
        %1157 = vmatprep.subr.bf16.mxu0 0
        %1158 = vmatpush1.bf16.msra.mxu0 0
        %1159 = vmatprep.subr.bf16.mxu0 0
        %1160 = vmatpush1.bf16.msra.mxu0 %v1143
        %1161 = vmatprep.subr.bf16.mxu0 0
        %1162 = vmatpush2.bf16.msra.mxu0 0
        %1163 = vmatprep.subr.bf16.mxu0 0
        %1164 = vmatpush2.bf16.msra.mxu0 0
        %1165 = vmatprep.subr.bf16.mxu0 0
        %1166 = vmatpush2.bf16.msra.mxu0 0
        %1167 = vmatprep.subr.bf16.mxu0 0
        %1168 = vmatpush2.bf16.msra.mxu0 0
        %1169 = vmatprep.subr.bf16.mxu0 0
        %1170 = vmatpush2.bf16.msra.mxu0 0
        %1171 = vmatprep.subr.bf16.mxu0 0
        %1172 = vmatpush2.bf16.msra.mxu0 0
        %1173 = vmatprep.subr.bf16.mxu0 0
        %1174 = vmatpush2.bf16.msra.mxu0 0
        %1175 = vmatprep.subr.bf16.mxu0 0
        %1176 = vmatpush2.bf16.msra.mxu0 0
        %1177 = vmatprep.mubr.bf16.mxu0 0
        %1178 = vmatmul.mubr.bf16.gmra.mxu0 %v1140
        %v1179 = vpop.f32.mrf.mxu0
        %v1180 = vadd.f32 0.0, %v1179
        %v1181 = vpop.f32.mrf.mxu0
        %v1182 = vpop.f32.mrf.mxu0
        %v1183 = vpop.f32.mrf.mxu0
        %1184 = vdwg.mxu0
        %1185 = vrot.lane.b32.xlu0 %v537, 64
        %v1186 = vpop.permute.xlu0 %1185
        %v1188 = vsel %vm545, %v1026, 0
        %v1191 = vsel %vm1045, %v1186, 0
        %1193 = vmatprep.subr.bf16.mxu0 0
        %1194 = vmatpush1.bf16.msra.mxu0 0
        %1195 = vmatprep.subr.bf16.mxu0 0
        %1196 = vmatpush1.bf16.msra.mxu0 0
        %1197 = vmatprep.subr.bf16.mxu0 0
        %1198 = vmatpush1.bf16.msra.mxu0 0
        %1199 = vmatprep.subr.bf16.mxu0 0
        %1200 = vmatpush1.bf16.msra.mxu0 0
        %1201 = vmatprep.subr.bf16.mxu0 0
        %1202 = vmatpush1.bf16.msra.mxu0 0
        %1203 = vmatprep.subr.bf16.mxu0 0
        %1204 = vmatpush1.bf16.msra.mxu0 0
        %1205 = vmatprep.subr.bf16.mxu0 0
        %1206 = vmatpush1.bf16.msra.mxu0 0
        %1207 = vmatprep.subr.bf16.mxu0 0
        %1208 = vmatpush1.bf16.msra.mxu0 %v1191
        %1209 = vmatprep.subr.bf16.mxu0 0
        %1210 = vmatpush2.bf16.msra.mxu0 0
        %1211 = vmatprep.subr.bf16.mxu0 0
        %1212 = vmatpush2.bf16.msra.mxu0 0
        %1213 = vmatprep.subr.bf16.mxu0 0
        %1214 = vmatpush2.bf16.msra.mxu0 0
        %1215 = vmatprep.subr.bf16.mxu0 0
        %1216 = vmatpush2.bf16.msra.mxu0 0
        %1217 = vmatprep.subr.bf16.mxu0 0
        %1218 = vmatpush2.bf16.msra.mxu0 0
        %1219 = vmatprep.subr.bf16.mxu0 0
        %1220 = vmatpush2.bf16.msra.mxu0 0
        %1221 = vmatprep.subr.bf16.mxu0 0
        %1222 = vmatpush2.bf16.msra.mxu0 0
        %1223 = vmatprep.subr.bf16.mxu0 0
        %1224 = vmatpush2.bf16.msra.mxu0 0
        %1225 = vmatprep.mubr.bf16.mxu0 0
        %1226 = vmatmul.mubr.bf16.gmra.mxu0 %v1188
        %v1227 = vpop.f32.mrf.mxu0
        %v1228 = vadd.f32 0.0, %v1227
        %v1229 = vpop.f32.mrf.mxu0
        %v1230 = vpop.f32.mrf.mxu0
        %v1231 = vpop.f32.mrf.mxu0
        %1232 = vdwg.mxu0
        %1233 = vrot.lane.b32.xlu0 %v538, 64
        %v1234 = vpop.permute.xlu0 %1233
        %v1236 = vsel %vm545, %v1027, 0
        %v1239 = vsel %vm1045, %v1234, 0
        %1241 = vmatprep.subr.bf16.mxu0 0
        %1242 = vmatpush1.bf16.msra.mxu0 0
        %1243 = vmatprep.subr.bf16.mxu0 0
        %1244 = vmatpush1.bf16.msra.mxu0 0
        %1245 = vmatprep.subr.bf16.mxu0 0
        %1246 = vmatpush1.bf16.msra.mxu0 0
        %1247 = vmatprep.subr.bf16.mxu0 0
        %1248 = vmatpush1.bf16.msra.mxu0 0
        %1249 = vmatprep.subr.bf16.mxu0 0
        %1250 = vmatpush1.bf16.msra.mxu0 0
        %1251 = vmatprep.subr.bf16.mxu0 0
        %1252 = vmatpush1.bf16.msra.mxu0 0
        %1253 = vmatprep.subr.bf16.mxu0 0
        %1254 = vmatpush1.bf16.msra.mxu0 0
        %1255 = vmatprep.subr.bf16.mxu0 0
        %1256 = vmatpush1.bf16.msra.mxu0 %v1239
        %1257 = vmatprep.subr.bf16.mxu0 0
        %1258 = vmatpush2.bf16.msra.mxu0 0
        %1259 = vmatprep.subr.bf16.mxu0 0
        %1260 = vmatpush2.bf16.msra.mxu0 0
        %1261 = vmatprep.subr.bf16.mxu0 0
        %1262 = vmatpush2.bf16.msra.mxu0 0
        %1263 = vmatprep.subr.bf16.mxu0 0
        %1264 = vmatpush2.bf16.msra.mxu0 0
        %1265 = vmatprep.subr.bf16.mxu0 0
        %1266 = vmatpush2.bf16.msra.mxu0 0
        %1267 = vmatprep.subr.bf16.mxu0 0
        %1268 = vmatpush2.bf16.msra.mxu0 0
        %1269 = vmatprep.subr.bf16.mxu0 0
        %1270 = vmatpush2.bf16.msra.mxu0 0
        %1271 = vmatprep.subr.bf16.mxu0 0
        %1272 = vmatpush2.bf16.msra.mxu0 0
        %1273 = vmatprep.mubr.bf16.mxu0 0
        %1274 = vmatmul.mubr.bf16.gmra.mxu0 %v1236
        %v1275 = vpop.f32.mrf.mxu0
        %v1276 = vadd.f32 0.0, %v1275
        %v1277 = vpop.f32.mrf.mxu0
        %v1278 = vpop.f32.mrf.mxu0
        %v1279 = vpop.f32.mrf.mxu0
        %1280 = vdwg.mxu0
        %1281 = vrot.lane.b32.xlu0 %v539, 64
        %v1282 = vpop.permute.xlu0 %1281
        %v1284 = vsel %vm545, %v1028, 0
        %v1287 = vsel %vm1045, %v1282, 0
        %1289 = vmatprep.subr.bf16.mxu0 0
        %1290 = vmatpush1.bf16.msra.mxu0 0
        %1291 = vmatprep.subr.bf16.mxu0 0
        %1292 = vmatpush1.bf16.msra.mxu0 0
        %1293 = vmatprep.subr.bf16.mxu0 0
        %1294 = vmatpush1.bf16.msra.mxu0 0
        %1295 = vmatprep.subr.bf16.mxu0 0
        %1296 = vmatpush1.bf16.msra.mxu0 0
        %1297 = vmatprep.subr.bf16.mxu0 0
        %1298 = vmatpush1.bf16.msra.mxu0 0
        %1299 = vmatprep.subr.bf16.mxu0 0
        %1300 = vmatpush1.bf16.msra.mxu0 0
        %1301 = vmatprep.subr.bf16.mxu0 0
        %1302 = vmatpush1.bf16.msra.mxu0 0
        %1303 = vmatprep.subr.bf16.mxu0 0
        %1304 = vmatpush1.bf16.msra.mxu0 %v1287
        %1305 = vmatprep.subr.bf16.mxu0 0
        %1306 = vmatpush2.bf16.msra.mxu0 0
        %1307 = vmatprep.subr.bf16.mxu0 0
        %1308 = vmatpush2.bf16.msra.mxu0 0
        %1309 = vmatprep.subr.bf16.mxu0 0
        %1310 = vmatpush2.bf16.msra.mxu0 0
        %1311 = vmatprep.subr.bf16.mxu0 0
        %1312 = vmatpush2.bf16.msra.mxu0 0
        %1313 = vmatprep.subr.bf16.mxu0 0
        %1314 = vmatpush2.bf16.msra.mxu0 0
        %1315 = vmatprep.subr.bf16.mxu0 0
        %1316 = vmatpush2.bf16.msra.mxu0 0
        %1317 = vmatprep.subr.bf16.mxu0 0
        %1318 = vmatpush2.bf16.msra.mxu0 0
        %1319 = vmatprep.subr.bf16.mxu0 0
        %1320 = vmatpush2.bf16.msra.mxu0 0
        %1321 = vmatprep.mubr.bf16.mxu0 0
        %1322 = vmatmul.mubr.bf16.gmra.mxu0 %v1284
        %v1323 = vpop.f32.mrf.mxu0
        %v1324 = vadd.f32 0.0, %v1323
        %v1325 = vpop.f32.mrf.mxu0
        %v1326 = vpop.f32.mrf.mxu0
        %v1327 = vpop.f32.mrf.mxu0
        %1328 = vdwg.mxu0
        %1329 = vrot.lane.b32.xlu0 %v540, 64
        %v1330 = vpop.permute.xlu0 %1329
        %v1332 = vsel %vm545, %v1029, 0
        %v1335 = vsel %vm1045, %v1330, 0
        %1337 = vmatprep.subr.bf16.mxu0 0
        %1338 = vmatpush1.bf16.msra.mxu0 0
        %1339 = vmatprep.subr.bf16.mxu0 0
        %1340 = vmatpush1.bf16.msra.mxu0 0
        %1341 = vmatprep.subr.bf16.mxu0 0
        %1342 = vmatpush1.bf16.msra.mxu0 0
        %1343 = vmatprep.subr.bf16.mxu0 0
        %1344 = vmatpush1.bf16.msra.mxu0 0
        %1345 = vmatprep.subr.bf16.mxu0 0
        %1346 = vmatpush1.bf16.msra.mxu0 0
        %1347 = vmatprep.subr.bf16.mxu0 0
        %1348 = vmatpush1.bf16.msra.mxu0 0
        %1349 = vmatprep.subr.bf16.mxu0 0
        %1350 = vmatpush1.bf16.msra.mxu0 0
        %1351 = vmatprep.subr.bf16.mxu0 0
        %1352 = vmatpush1.bf16.msra.mxu0 %v1335
        %1353 = vmatprep.subr.bf16.mxu0 0
        %1354 = vmatpush2.bf16.msra.mxu0 0
        %1355 = vmatprep.subr.bf16.mxu0 0
        %1356 = vmatpush2.bf16.msra.mxu0 0
        %1357 = vmatprep.subr.bf16.mxu0 0
        %1358 = vmatpush2.bf16.msra.mxu0 0
        %1359 = vmatprep.subr.bf16.mxu0 0
        %1360 = vmatpush2.bf16.msra.mxu0 0
        %1361 = vmatprep.subr.bf16.mxu0 0
        %1362 = vmatpush2.bf16.msra.mxu0 0
        %1363 = vmatprep.subr.bf16.mxu0 0
        %1364 = vmatpush2.bf16.msra.mxu0 0
        %1365 = vmatprep.subr.bf16.mxu0 0
        %1366 = vmatpush2.bf16.msra.mxu0 0
        %1367 = vmatprep.subr.bf16.mxu0 0
        %1368 = vmatpush2.bf16.msra.mxu0 0
        %1369 = vmatprep.mubr.bf16.mxu0 0
        %1370 = vmatmul.mubr.bf16.gmra.mxu0 %v1332
        %v1371 = vpop.f32.mrf.mxu0
        %v1372 = vadd.f32 0.0, %v1371
        %v1373 = vpop.f32.mrf.mxu0
        %v1374 = vpop.f32.mrf.mxu0
        %v1375 = vpop.f32.mrf.mxu0
        %1376 = vdwg.mxu0
        %1377 = vrot.lane.b32.xlu0 %v541, 64
        %v1378 = vpop.permute.xlu0 %1377
        %v1380 = vsel %vm545, %v1030, 0
        %v1383 = vsel %vm1045, %v1378, 0
        %1385 = vmatprep.subr.bf16.mxu0 0
        %1386 = vmatpush1.bf16.msra.mxu0 0
        %1387 = vmatprep.subr.bf16.mxu0 0
        %1388 = vmatpush1.bf16.msra.mxu0 0
        %1389 = vmatprep.subr.bf16.mxu0 0
        %1390 = vmatpush1.bf16.msra.mxu0 0
        %1391 = vmatprep.subr.bf16.mxu0 0
        %1392 = vmatpush1.bf16.msra.mxu0 0
        %1393 = vmatprep.subr.bf16.mxu0 0
        %1394 = vmatpush1.bf16.msra.mxu0 0
        %1395 = vmatprep.subr.bf16.mxu0 0
        %1396 = vmatpush1.bf16.msra.mxu0 0
        %1397 = vmatprep.subr.bf16.mxu0 0
        %1398 = vmatpush1.bf16.msra.mxu0 0
        %1399 = vmatprep.subr.bf16.mxu0 0
        %1400 = vmatpush1.bf16.msra.mxu0 %v1383
        %1401 = vmatprep.subr.bf16.mxu0 0
        %1402 = vmatpush2.bf16.msra.mxu0 0
        %1403 = vmatprep.subr.bf16.mxu0 0
        %1404 = vmatpush2.bf16.msra.mxu0 0
        %1405 = vmatprep.subr.bf16.mxu0 0
        %1406 = vmatpush2.bf16.msra.mxu0 0
        %1407 = vmatprep.subr.bf16.mxu0 0
        %1408 = vmatpush2.bf16.msra.mxu0 0
        %1409 = vmatprep.subr.bf16.mxu0 0
        %1410 = vmatpush2.bf16.msra.mxu0 0
        %1411 = vmatprep.subr.bf16.mxu0 0
        %1412 = vmatpush2.bf16.msra.mxu0 0
        %1413 = vmatprep.subr.bf16.mxu0 0
        %1414 = vmatpush2.bf16.msra.mxu0 0
        %1415 = vmatprep.subr.bf16.mxu0 0
        %1416 = vmatpush2.bf16.msra.mxu0 0
        %1417 = vmatprep.mubr.bf16.mxu0 0
        %1418 = vmatmul.mubr.bf16.gmra.mxu0 %v1380
        %v1419 = vpop.f32.mrf.mxu0
        %v1420 = vadd.f32 0.0, %v1419
        %v1421 = vpop.f32.mrf.mxu0
        %v1422 = vpop.f32.mrf.mxu0
        %v1423 = vpop.f32.mrf.mxu0
        %1424 = vdwg.mxu0
        %1427 = vrot.lane.b32.xlu0 %v1180, 8
        %v1428 = vpop.permute.xlu0 %1427
        %1429 = vrot.lane.b32.xlu0 %v1228, 8
        %v1430 = vpop.permute.xlu0 %1429
        %1435 = vrot.lane.b32.xlu0 %v1276, 16
        %v1436 = vpop.permute.xlu0 %1435
        %1437 = vrot.lane.b32.xlu0 %v1324, 16
        %v1438 = vpop.permute.xlu0 %1437
        %1443 = vrot.lane.b32.xlu0 %v1372, 24
        %v1444 = vpop.permute.xlu0 %1443
        %1445 = vrot.lane.b32.xlu0 %v1420, 24
        %v1446 = vpop.permute.xlu0 %1445
        %v1449 = vsel %vm545, %v1084, %v1428
        %v1450 = vsel %vm545, %v1132, %v1430
        %vm1451 = vcmask 130048
        %v1452 = vsel %vm1451, %v1449, %v1436
        %v1453 = vsel %vm1451, %v1450, %v1438
        %vm1454 = vcmask 195584
        %v1455 = vsel %vm1454, %v1452, %v1444
        %v1456 = vsel %vm1454, %v1453, %v1446
        %v1457 = vpack.c.bf16 %v1456, %v1455
        %v1458 = vld [vmem:[%s376] sm:$0xf]
        %v1459 = vld [vmem:[%s376 + $0x4] sm:$0xf]
        %v1460 = vld [vmem:[%s376 + $0x8] sm:$0xf]
        %v1461 = vld [vmem:[%s376 + $0xc] sm:$0xf]
        %v1462 = vlaneseq
        %v1463 = vshrl.u32 %v1462, 7
        %v1464 = vsub.s32 0, %v1463
        %v1465 = vrot.slane %v410, %v1464
        %v1470 = vunpack.c.l.b16 %v1458
        %v1471 = vunpack.c.l.b16 %v1459
        %v1472 = vunpack.c.l.b16 %v1460
        %v1473 = vunpack.c.l.b16 %v1461
        %v1474 = vpack.c.b16 %v1471, %v1470
        %v1475 = vpack.c.b16 %v1473, %v1472
        %v1479 = vsel %vm413, %v1457, 0
        %1481 = vmatprep.subr.bf16.mxu0 0
        %1482 = vmatpush1.bf16.msra.mxu0 0
        %1483 = vmatprep.subr.bf16.mxu0 0
        %1484 = vmatpush1.bf16.msra.mxu0 0
        %1485 = vmatprep.subr.bf16.mxu0 0
        %1486 = vmatpush1.bf16.msra.mxu0 0
        %1487 = vmatprep.subr.bf16.mxu0 0
        %1488 = vmatpush1.bf16.msra.mxu0 0
        %1489 = vmatprep.subr.bf16.mxu0 0
        %1490 = vmatpush1.bf16.msra.mxu0 0
        %1491 = vmatprep.subr.bf16.mxu0 0
        %1492 = vmatpush1.bf16.msra.mxu0 0
        %1493 = vmatprep.subr.bf16.mxu0 0
        %1494 = vmatpush1.bf16.msra.mxu0 %v1475
        %1495 = vmatprep.subr.bf16.mxu0 0
        %1496 = vmatpush1.bf16.msra.mxu0 %v1474
        %1497 = vmatprep.subr.bf16.mxu0 0
        %1498 = vmatpush2.bf16.msra.mxu0 0
        %1499 = vmatprep.subr.bf16.mxu0 0
        %1500 = vmatpush2.bf16.msra.mxu0 0
        %1501 = vmatprep.subr.bf16.mxu0 0
        %1502 = vmatpush2.bf16.msra.mxu0 0
        %1503 = vmatprep.subr.bf16.mxu0 0
        %1504 = vmatpush2.bf16.msra.mxu0 0
        %1505 = vmatprep.subr.bf16.mxu0 0
        %1506 = vmatpush2.bf16.msra.mxu0 0
        %1507 = vmatprep.subr.bf16.mxu0 0
        %1508 = vmatpush2.bf16.msra.mxu0 0
        %1509 = vmatprep.subr.bf16.mxu0 0
        %1510 = vmatpush2.bf16.msra.mxu0 0
        %1511 = vmatprep.subr.bf16.mxu0 0
        %1512 = vmatpush2.bf16.msra.mxu0 0
        %1513 = vmatprep.mubr.bf16.mxu0 0
        %1514 = vmatmul.mubr.bf16.gmra.mxu0 %v1479
        %v1515 = vpop.f32.mrf.mxu0
        %v1516 = vadd.f32 %v1465, %v1515
        %v1517 = vpop.f32.mrf.mxu0
        %v1518 = vpop.f32.mrf.mxu0
        %v1519 = vadd.f32 %v1465, %v1518
        %v1520 = vpop.f32.mrf.mxu0
        %1521 = vdwg.mxu0
        %v1522 = vadd.f32 %v404, %v1516
        %v1523 = vadd.f32 %v405, %v1519
        %v1524 = vsel %vm413, %v1522, 0.0
        %1525 = vadd.xlane.f32.xlu0 %v1524
        %v1526 = vpop.xlane.xlu0 %1525
        %v1527 = vsel %vm413, %v1523, 0.0
        %1528 = vadd.xlane.f32.xlu0 %v1527
        %v1529 = vpop.xlane.xlu0 %1528
        %v1530 = vmul.f32 %v1526, %v420
        %v1531 = vmul.f32 %v1529, %v420
        %v1532 = vsub.f32 %v1522, %v1530
        %v1533 = vsub.f32 %v1523, %v1531
        %v1534 = vmul.f32 %v1532, %v1532
        %v1535 = vmul.f32 %v1533, %v1533
        %v1536 = vsel %vm413, %v1534, 0.0
        %1537 = vadd.xlane.f32.xlu0 %v1536
        %v1538 = vpop.xlane.xlu0 %1537
        %v1539 = vsel %vm413, %v1535, 0.0
        %1540 = vadd.xlane.f32.xlu0 %v1539
        %v1541 = vpop.xlane.xlu0 %1540
        %v1542 = vmul.f32 %v1538, %v420
        %v1543 = vmul.f32 %v1541, %v420
        %v1544 = vadd.f32 %v1542, 1e-05
        %v1545 = vadd.f32 %v1543, 1e-05
        %v1546 = vrsqrt.pop %v1544
        %v1547 = vrsqrt.pop %v1545
        %v1548 = vmul.f32 %v1532, %v1546
        %v1549 = vmul.f32 %v1533, %v1547
        %v1550 = vlaneseq
        %v1551 = vshrl.u32 %v1550, 7
        %v1552 = vsub.s32 0, %v1551
        %v1553 = vrot.slane %v408, %v1552
        %v1554 = vmul.f32 %v1548, %v1553
        %v1555 = vmul.f32 %v1549, %v1553
        %v1556 = vlaneseq
        %v1557 = vshrl.u32 %v1556, 7
        %v1558 = vsub.s32 0, %v1557
        %v1559 = vrot.slane %v409, %v1558
        %v1560 = vadd.f32 %v1554, %v1559
        %v1561 = vadd.f32 %v1555, %v1559
        %v1562 = vpack.c.bf16 %v1561, %v1560
        %v1563 = vld [vmem:[%s381] sm:$0xf]
        %v1564 = vld [vmem:[%s381 + $0x4] sm:$0xf]
        %v1565 = vld [vmem:[%s381 + $0x8] sm:$0xf]
        %v1566 = vld [vmem:[%s381 + $0xc] sm:$0xf]
        %v1568 = vlaneseq
        %v1569 = vshrl.u32 %v1568, 7
        %v1570 = vsub.s32 0, %v1569
        %v1571 = vrot.slane %v412, %v1570
        %v1577 = vunpack.c.l.b16 %v1563
        %v1578 = vunpack.c.l.b16 %v1564
        %v1579 = vunpack.c.l.b16 %v1565
        %v1580 = vunpack.c.l.b16 %v1566
        %v1581 = vpack.c.b16 %v1578, %v1577
        %v1582 = vpack.c.b16 %v1580, %v1579
        %v1586 = vsel %vm413, %v1562, 0
        %1588 = vmatprep.subr.bf16.mxu0 0
        %1589 = vmatpush1.bf16.msra.mxu0 0
        %1590 = vmatprep.subr.bf16.mxu0 0
        %1591 = vmatpush1.bf16.msra.mxu0 0
        %1592 = vmatprep.subr.bf16.mxu0 0
        %1593 = vmatpush1.bf16.msra.mxu0 0
        %1594 = vmatprep.subr.bf16.mxu0 0
        %1595 = vmatpush1.bf16.msra.mxu0 0
        %1596 = vmatprep.subr.bf16.mxu0 0
        %1597 = vmatpush1.bf16.msra.mxu0 0
        %1598 = vmatprep.subr.bf16.mxu0 0
        %1599 = vmatpush1.bf16.msra.mxu0 0
        %1600 = vmatprep.subr.bf16.mxu0 0
        %1601 = vmatpush1.bf16.msra.mxu0 %v1582
        %1602 = vmatprep.subr.bf16.mxu0 0
        %1603 = vmatpush1.bf16.msra.mxu0 %v1581
        %1604 = vmatprep.subr.bf16.mxu0 0
        %1605 = vmatpush2.bf16.msra.mxu0 0
        %1606 = vmatprep.subr.bf16.mxu0 0
        %1607 = vmatpush2.bf16.msra.mxu0 0
        %1608 = vmatprep.subr.bf16.mxu0 0
        %1609 = vmatpush2.bf16.msra.mxu0 0
        %1610 = vmatprep.subr.bf16.mxu0 0
        %1611 = vmatpush2.bf16.msra.mxu0 0
        %1612 = vmatprep.subr.bf16.mxu0 0
        %1613 = vmatpush2.bf16.msra.mxu0 0
        %1614 = vmatprep.subr.bf16.mxu0 0
        %1615 = vmatpush2.bf16.msra.mxu0 0
        %1616 = vmatprep.subr.bf16.mxu0 0
        %1617 = vmatpush2.bf16.msra.mxu0 0
        %1618 = vmatprep.subr.bf16.mxu0 0
        %1619 = vmatpush2.bf16.msra.mxu0 0
        %1620 = vmatprep.mubr.bf16.mxu0 0
        %1621 = vmatmul.mubr.bf16.gmra.mxu0 %v1586
        %v1622 = vpop.f32.mrf.mxu0
        %v1623 = vadd.f32 %v1571, %v1622
        %v1624 = vpop.f32.mrf.mxu0
        %v1625 = vpop.f32.mrf.mxu0
        %v1626 = vadd.f32 %v1571, %v1625
        %v1627 = vpop.f32.mrf.mxu0
        %1628 = vdwg.mxu0
        %v1629 = vmax.f32 %v1623, 0.0
        %v1630 = vmax.f32 %v1626, 0.0
        %v1631 = vpack.c.bf16 %v1630, %v1629
        %v1632 = vld [vmem:[%s386] sm:$0xf]
        %v1633 = vld [vmem:[%s386 + $0x4] sm:$0xf]
        %v1634 = vld [vmem:[%s386 + $0x8] sm:$0xf]
        %v1635 = vld [vmem:[%s386 + $0xc] sm:$0xf]
        %v1636 = vld [vmem:[%s386 + $0x10] sm:$0xf]
        %v1637 = vld [vmem:[%s386 + $0x14] sm:$0xf]
        %v1638 = vld [vmem:[%s386 + $0x18] sm:$0xf]
        %v1639 = vld [vmem:[%s386 + $0x1c] sm:$0xf]
        %v1640 = vld [vmem:[%s386 + $0x20] sm:$0xf]
        %v1641 = vld [vmem:[%s386 + $0x24] sm:$0xf]
        %v1642 = vld [vmem:[%s386 + $0x28] sm:$0xf]
        %v1643 = vld [vmem:[%s386 + $0x2c] sm:$0xf]
        %v1644 = vld [vmem:[%s386 + $0x30] sm:$0xf]
        %v1645 = vld [vmem:[%s386 + $0x34] sm:$0xf]
        %v1646 = vld [vmem:[%s386 + $0x38] sm:$0xf]
        %v1647 = vld [vmem:[%s386 + $0x3c] sm:$0xf]
        %v1648 = vlaneseq
        %v1649 = vshrl.u32 %v1648, 7
        %v1650 = vsub.s32 0, %v1649
        %v1651 = vrot.slane %v411, %v1650
        %v1668 = vunpack.c.l.b16 %v1632
        %v1669 = vunpack.c.l.b16 %v1633
        %v1670 = vunpack.c.l.b16 %v1634
        %v1671 = vunpack.c.l.b16 %v1635
        %v1672 = vunpack.c.l.b16 %v1636
        %v1673 = vunpack.c.l.b16 %v1637
        %v1674 = vunpack.c.l.b16 %v1638
        %v1675 = vunpack.c.l.b16 %v1639
        %v1676 = vunpack.c.l.b16 %v1640
        %v1677 = vunpack.c.l.b16 %v1641
        %v1678 = vunpack.c.l.b16 %v1642
        %v1679 = vunpack.c.l.b16 %v1643
        %v1680 = vunpack.c.l.b16 %v1644
        %v1681 = vunpack.c.l.b16 %v1645
        %v1682 = vunpack.c.l.b16 %v1646
        %v1683 = vunpack.c.l.b16 %v1647
        %v1684 = vpack.c.b16 %v1669, %v1668
        %v1685 = vpack.c.b16 %v1671, %v1670
        %v1686 = vpack.c.b16 %v1673, %v1672
        %v1687 = vpack.c.b16 %v1675, %v1674
        %v1688 = vpack.c.b16 %v1677, %v1676
        %v1689 = vpack.c.b16 %v1679, %v1678
        %v1690 = vpack.c.b16 %v1681, %v1680
        %v1691 = vpack.c.b16 %v1683, %v1682
        %1700 = vmatprep.subr.bf16.mxu0 0
        %1701 = vmatpush1.bf16.msra.mxu0 %v1691
        %1702 = vmatprep.subr.bf16.mxu0 0
        %1703 = vmatpush1.bf16.msra.mxu0 %v1690
        %1704 = vmatprep.subr.bf16.mxu0 0
        %1705 = vmatpush1.bf16.msra.mxu0 %v1689
        %1706 = vmatprep.subr.bf16.mxu0 0
        %1707 = vmatpush1.bf16.msra.mxu0 %v1688
        %1708 = vmatprep.subr.bf16.mxu0 0
        %1709 = vmatpush1.bf16.msra.mxu0 %v1687
        %1710 = vmatprep.subr.bf16.mxu0 0
        %1711 = vmatpush1.bf16.msra.mxu0 %v1686
        %1712 = vmatprep.subr.bf16.mxu0 0
        %1713 = vmatpush1.bf16.msra.mxu0 %v1685
        %1714 = vmatprep.subr.bf16.mxu0 0
        %1715 = vmatpush1.bf16.msra.mxu0 %v1684
        %1716 = vmatprep.subr.bf16.mxu0 0
        %1717 = vmatpush2.bf16.msra.mxu0 0
        %1718 = vmatprep.subr.bf16.mxu0 0
        %1719 = vmatpush2.bf16.msra.mxu0 0
        %1720 = vmatprep.subr.bf16.mxu0 0
        %1721 = vmatpush2.bf16.msra.mxu0 0
        %1722 = vmatprep.subr.bf16.mxu0 0
        %1723 = vmatpush2.bf16.msra.mxu0 0
        %1724 = vmatprep.subr.bf16.mxu0 0
        %1725 = vmatpush2.bf16.msra.mxu0 0
        %1726 = vmatprep.subr.bf16.mxu0 0
        %1727 = vmatpush2.bf16.msra.mxu0 0
        %1728 = vmatprep.subr.bf16.mxu0 0
        %1729 = vmatpush2.bf16.msra.mxu0 0
        %1730 = vmatprep.subr.bf16.mxu0 0
        %1731 = vmatpush2.bf16.msra.mxu0 0
        %1732 = vmatprep.mubr.bf16.mxu0 0
        %1733 = vmatmul.mubr.bf16.gmra.mxu0 %v1631
        %v1734 = vpop.f32.mrf.mxu0
        %v1735 = vadd.f32 %v1651, %v1734
        %v1736 = vpop.f32.mrf.mxu0
        %v1737 = vpop.f32.mrf.mxu0
        %v1738 = vadd.f32 %v1651, %v1737
        %v1739 = vpop.f32.mrf.mxu0
        %1740 = vdwg.mxu0
        %v1741 = vadd.f32 %v1560, %v1735
        %v1742 = vadd.f32 %v1561, %v1738
        %1743 = vst.msk [vmem:[#allocation2] sm:$0xff] %vm413, %v1741
        %1744 = vst.msk [vmem:[#allocation2 + $0x8] sm:$0xff] %vm413, %v1742
        %s1745 = sand.u32 %s230, 1
        %s1746 = scalar_lea.sflag [#allocation5], %s1745
        %s1747 = sand.u32 %s230, 1
        %s1748 = smul.addr %s1747, 32
        %s1749 = scalar_lea.vmem [#allocation4], %s1748
        // Predicated region
        $region53: #{encoder_mod_forward.1} parent=47 // pred_check
          %p1750 = pneg %p214
        $region54: #{encoder_mod_forward.1} parent=47 // pred_check_branch
          %1752 = sbr.rel (%p1750) target = $region56
        $region55: #{encoder_mod_forward.1} parent=47 // pred_region
          %s1754 = ssub.s32 256, 256
          %1755 = vsyncadd [#allocation3], %s1754
          %s1756 = sshll.u32 [#allocation2], 4
          %s1757 = int_to_ptr.vmem [resolvable:$true] %s1756
          %1762 = dma.vmem_to_hbm [thread:$0]  %s1757, 256, %s7, [#allocation3], 128, 128, 8
        $region56: #{encoder_mod_forward.1} parent=47 // pred_fallthru
          _
        // Predicated region
        $region57: #{encoder_mod_forward.1} parent=47 // pred_check
          %p1763 = pneg %p240
        $region58: #{encoder_mod_forward.1} parent=47 // pred_check_branch
          %1765 = sbr.rel (%p1763) target = $region60
        $region59: #{encoder_mod_forward.1} parent=47 // pred_region
          %s1767 = ssub.s32 512, 512
          %1768 = vsyncadd %s1746, %s1767
          %s1769 = smul.addr %s24, 8
          %s1770 = smul.addr %s1769, 64
          %s1771 = scalar_lea.hbm %s8, %s1770
          %s1772 = sshll.u32 %s1749, 4
          %s1773 = int_to_ptr.vmem [resolvable:$true] %s1772
          %1778 = dma.vmem_to_hbm [thread:$0]  %s1773, 512, %s1771, %s1746, 64, 64, 4
        $region60: #{encoder_mod_forward.1} parent=47 // pred_fallthru
          _
        // Predicated region
        $region61: #{encoder_mod_forward.1} parent=47 // pred_check
          %p1779 = pneg %p214
        $region62: #{encoder_mod_forward.1} parent=47 // pred_check_branch
          %1781 = sbr.rel (%p1779) target = $region64
        $region63: #{encoder_mod_forward.1} parent=47 // pred_region
          %1782 = dma.done [#allocation3], 256
        $region64: #{encoder_mod_forward.1} parent=47 // pred_fallthru
          _
      $region48: #{encoder_mod_forward.1} parent=5 // pred_fallthru
        _
      %p1783 = scmp.le.s32.totalorder 2, %s19
      // Predicated region
      $region65: #{encoder_mod_forward.1} parent=5 // pred_check
        %p1784 = pneg %p1783
      $region66: #{encoder_mod_forward.1} parent=5 // pred_check_branch
        %1786 = sbr.rel (%p1784) target = $region68
      $region67: #{encoder_mod_forward.1} parent=5 // pred_region
        %s1787 = ssub.s32 %s19, 2
        // Predicated region
        $region69: #{encoder_mod_forward.1} parent=67 // pred_check
          %p1788 = pneg %p246
        $region70: #{encoder_mod_forward.1} parent=67 // pred_check_branch
          %1790 = sbr.rel (%p1788) target = $region72
        $region71: #{encoder_mod_forward.1} parent=67 // pred_region
          %s1791 = sand.u32 %s231, 1
          %s1792 = scalar_lea.sflag [#allocation5], %s1791
          %s1793 = sand.u32 %s231, 1
          %s1794 = smul.addr %s1793, 32
          %s1795 = scalar_lea.vmem [#allocation4], %s1794
          %1796 = dma.done %s1792, 512
        $region72: #{encoder_mod_forward.1} parent=67 // pred_fallthru
          _
      $region68: #{encoder_mod_forward.1} parent=5 // pred_fallthru
        _
    $region6: #{encoder_mod_forward.1} parent=1 // loop_footer
      %s23 = sadd.s32 1, %s19
    $region7: #{encoder_mod_forward.1} parent=1 // loop_footer_branch
      %18 = sbr.rel target = $region3
    $region8: #{encoder_mod_forward.1} parent=1 // loop_exit
      _
    %1797 = vsyncpa [#allocation3], 1
    %s1798 = scalar_lea.sflag [#allocation3], 1
    %1799 = vsyncpa %s1798, 1
    %1800 = vsyncpa [#allocation5], 1
    %s1801 = scalar_lea.sflag [#allocation5], 1
    %1802 = vsyncpa %s1801, 1

</llo_original>
